<compile_context>
chip_gen: v5e
topology: v5e:2x2
jax: 0.10.0
libtpu: 0.0.40
codegen_flags: <defaults>
</compile_context>

<pallas_src>
import jax
import jax.numpy as jnp
from jax.experimental import pallas as pl
from jax.experimental.pallas import tpu as pltpu


def _round_up(n, m):
    return ((n + m - 1) // m) * m


def _pack_weights(params):
    """Pack all LSTM + fc weights/biases into one f32 slab (one DMA).

    Row layout (lane width L = 8*H; each block's row count padded to 8):
        wih0   : (D_in, 4H)              lanes [0 : 4H]
        wcat   : [whh0 | wih1] (H, 8H)   lanes [0 : 8H]   <- fused matmul weight
        whh1   : (H, 4H)                 lanes [0 : 4H]
        wfc    : (H, 128)                lanes [0 : 128]  <- lane-dense head
        bias01 : row 0 = [b0 | b1]       lanes [0 : 8H]
        biasfc : row 0 = bfc (padded)    lanes [0 : 128]
    """
    D_in = params["wih0"].shape[0]
    H = params["whh0"].shape[0]
    O = params["wfc"].shape[1]
    L = 8 * H
    assert L >= 128 and O <= 128

    blocks, offs, row = [], {}, 0

    def add(name, a):
        nonlocal row
        offs[name] = row
        rows_pad = _round_up(a.shape[0], 8)
        a = jnp.pad(a.astype(jnp.float32),
                    ((0, rows_pad - a.shape[0]), (0, L - a.shape[1])))
        blocks.append(a)
        row += rows_pad

    add("wih0", params["wih0"])                                          # (D_in, 4H)
    add("wcat", jnp.concatenate([params["whh0"], params["wih1"]], axis=1))  # (H, 8H)
    add("whh1", params["whh1"])                                          # (H, 4H)
    add("wfc", jnp.pad(params["wfc"], ((0, 0), (0, 128 - O))))           # (H, 128)

    bias01 = jnp.zeros((1, L), jnp.float32)
    bias01 = bias01.at[0, 0:4 * H].set(params["b0"][0])
    bias01 = bias01.at[0, 4 * H:8 * H].set(params["b1"][0])
    add("bias01", bias01)

    biasfc = jnp.zeros((1, L), jnp.float32)
    biasfc = biasfc.at[0, 0:O].set(params["bfc"][0])
    add("biasfc", biasfc)

    return jnp.concatenate(blocks, axis=0), offs, (D_in, H, O)


def _make_kernel(T, Bp, D_in, H, offs):
    G = 4 * H
    r_wih0, r_wcat, r_whh1 = offs["wih0"], offs["wcat"], offs["whh1"]
    r_wfc, r_b01, r_bfc = offs["wfc"], offs["bias01"], offs["biasfc"]

    def kernel(x_ref, w_ref, out_ref):
        # x_ref : (T*Bp, D_in) time-major rows; w_ref : packed weight slab;
        # out_ref : (Bp, 128) lane-dense logits.

        def gate_math(gates, c_prev):
            # One full-vreg sigmoid + one full-vreg tanh on the packed (Bp, 4H)
            # gate tile; i, f, g, o are lane slices (PyTorch gate order).
            sig = jax.nn.sigmoid(gates)
            th = jnp.tanh(gates)
            i = sig[:, 0 * H:1 * H]
            f = sig[:, 1 * H:2 * H]
            g = th[:, 2 * H:3 * H]
            o = sig[:, 3 * H:4 * H]
            c_new = f * c_prev + i * g
            h_new = o * jnp.tanh(c_new)
            return h_new, c_new

        # ---- Hoisted layer-0 input projection: one batched MXU matmul over
        # all T timesteps; only recurrent matmuls stay on the serial chain.
        wih0 = w_ref[r_wih0:r_wih0 + D_in, 0:G]
        b0 = w_ref[r_b01:r_b01 + 1, 0:G]
        xproj0 = jnp.dot(x_ref[...], wih0,
                         preferred_element_type=jnp.float32) + b0     # (T*Bp, 4H)

        w_cat = w_ref[r_wcat:r_wcat + H, 0:2 * G]      # [whh0 | wih1], (H, 8H)
        whh1 = w_ref[r_whh1:r_whh1 + H, 0:G]
        # Hoist the layer-1 bias broadcast out of the unrolled loop.
        b1 = jnp.broadcast_to(w_ref[r_b01:r_b01 + 1, G:2 * G], (Bp, G))

        zh = jnp.zeros((Bp, H), jnp.float32)
        h1, c0, c1 = zh, zh, zh
        rec0 = jnp.zeros((Bp, G), jnp.float32)         # h0_{t-1} @ whh0 (0 at t=0)

        # ---- Interleaved layers, fully unrolled (static T).
        # Layer-1 step t depends only on layer-0 step t and layer-1 step t-1,
        # so the h1 @ whh1 matmul overlaps the h0 @ w_cat matmul each step.
        for t in range(T):
            gates0 = xproj0[t * Bp:(t + 1) * Bp, :] + rec0
            h0, c0 = gate_math(gates0, c0)
            # Fused MXU pass: one (Bp,H)@(H,8H) matmul yields the layer-0
            # recurrent term for step t+1 AND the layer-1 input for step t.
            cat = jnp.dot(h0, w_cat, preferred_element_type=jnp.float32)
            rec0 = cat[:, 0:G]
            gates1 = cat[:, G:2 * G] + b1 + jnp.dot(
                h1, whh1, preferred_element_type=jnp.float32)
            h1, c1 = gate_math(gates1, c1)

        # ---- Lane-dense fc head on the last timestep's top-layer hidden.
        wfc = w_ref[r_wfc:r_wfc + H, 0:128]
        bfc = w_ref[r_bfc:r_bfc + 1, 0:128]
        out_ref[...] = jnp.dot(h1, wfc, preferred_element_type=jnp.float32) + bfc

    return kernel


def emotion_classification_forward(x_btd, params):
    """x_btd: (B, T, D_in) float32, batch_first like the PyTorch module."""
    B, T, D_in = x_btd.shape
    Bp = _round_up(B, 8)                 # pad batch to the f32 sublane tile (8)

    slab, offs, (D_chk, H, O) = _pack_weights(params)
    assert D_chk == D_in

    # time-major + zero-pad batch + flatten to (T*Bp, D_in) rows; fuses into a
    # single tiny XLA copy.  Padded rows / lanes are sliced off the output.
    x_tbd = jnp.swapaxes(x_btd, 0, 1)                       # (T, B, D)
    x_tbd = jnp.pad(x_tbd, ((0, 0), (0, Bp - B), (0, 0)))   # (T, Bp, D)
    x_2d = x_tbd.reshape(T * Bp, D_in)

    vmem = pl.BlockSpec(memory_space=pltpu.MemorySpace.VMEM)
    out = pl.pallas_call(
        _make_kernel(T, Bp, D_in, H, offs),
        out_shape=jax.ShapeDtypeStruct((Bp, 128), jnp.float32),
        in_specs=[vmem, vmem],
        out_specs=vmem,
    )(x_2d, slab)
    return out[:B, :O]


def init_params(key, input_size, hidden_size, output_size):
    """Deterministic synthetic parameters (PyTorch-style uniform init)."""
    H = hidden_size
    k = 1.0 / jnp.sqrt(jnp.float32(H))
    keys = jax.random.split(key, 10)

    def u(kk, shape):
        return jax.random.uniform(kk, shape, jnp.float32, -k, k)

    # PyTorch stores W_ih as (4H, D_in); pre-transposed here to (D_in, 4H).
    # b = b_ih + b_hh folded into one (1, 4H) row per layer.
    return {
        "wih0": u(keys[0], (input_size, 4 * H)),
        "whh0": u(keys[1], (H, 4 * H)),
        "b0":   u(keys[2], (1, 4 * H)) + u(keys[3], (1, 4 * H)),
        "wih1": u(keys[4], (H, 4 * H)),
        "whh1": u(keys[5], (H, 4 * H)),
        "b1":   u(keys[6], (1, 4 * H)) + u(keys[7], (1, 4 * H)),
        "wfc":  u(keys[8], (H, output_size)),
        "bfc":  u(keys[9], (1, output_size)),
    }


def _reference_forward(x_btd, params):
    """Pure-JAX reference for correctness check."""
    B, T, D = x_btd.shape
    H = params["whh0"].shape[0]

    def cell(x_t, h, c, wih, whh, b):
        g = x_t @ wih + h @ whh + b
        i = jax.nn.sigmoid(g[:, 0 * H:1 * H])
        f = jax.nn.sigmoid(g[:, 1 * H:2 * H])
        gg = jnp.tanh(g[:, 2 * H:3 * H])
        o = jax.nn.sigmoid(g[:, 3 * H:4 * H])
        c = f * c + i * gg
        h = o * jnp.tanh(c)
        return h, c

    h0 = c0 = h1 = c1 = jnp.zeros((B, H), jnp.float32)
    for t in range(T):
        x_t = x_btd[:, t, :]
        h0, c0 = cell(x_t, h0, c0, params["wih0"], params["whh0"], params["b0"])
        h1, c1 = cell(h0, h1, c1, params["wih1"], params["whh1"], params["b1"])
    return h1 @ params["wfc"] + params["bfc"]


if __name__ == "__main__":
    # Small shapes consistent with the module: batch=2, seq=8, input=16,
    # hidden=32, num_layers=2 (fixed), 6 emotion classes.
    B, T, D_IN, H, O = 2, 8, 16, 32, 6

    key = jax.random.PRNGKey(0)
    k_x, k_p = jax.random.split(key)
    x = jax.random.normal(k_x, (B, T, D_IN), jnp.float32)
    params = init_params(k_p, D_IN, H, O)

    out = emotion_classification_forward(x, params)
    out = jax.block_until_ready(out)

    ref = _reference_forward(x, params)
    assert out.shape == (B, O)
    assert jnp.allclose(out, ref, atol=1e-4, rtol=1e-4), "mismatch vs reference"

    print("KERNEL_OK")
</pallas_src>

<mosaic_0001>
module attributes {stable_mosaic.version = 11 : i64} {
  func.func @kernel(%arg0: memref<64x16xf32, #tpu.memory_space<vmem>>, %arg1: memref<128x256xf32, #tpu.memory_space<vmem>>, %arg2: memref<8x128xf32, #tpu.memory_space<vmem>>) attributes {dimension_semantics = [], scalar_prefetch = 0 : i64, scratch_operands = 0 : i64, tpu.core_type = #tpu.core_type<tc>} {
    %c0 = arith.constant 0 : index
    %c0_0 = arith.constant 0 : index
    %0 = vector.load %arg1[%c0, %c0_0] : memref<128x256xf32, #tpu.memory_space<vmem>>, vector<16x128xf32>
    %c112 = arith.constant 112 : index
    %c0_1 = arith.constant 0 : index
    %1 = vector.load %arg1[%c112, %c0_1] : memref<128x256xf32, #tpu.memory_space<vmem>>, vector<1x128xf32>
    %c0_2 = arith.constant 0 : index
    %c0_3 = arith.constant 0 : index
    %2 = vector.load %arg0[%c0_2, %c0_3] : memref<64x16xf32, #tpu.memory_space<vmem>>, vector<64x16xf32>
    %cst = arith.constant dense<0.000000e+00> : vector<64x128xf32>
    %3 = tpu.matmul %2, %0, %cst {dimension_numbers = #tpu.dot_dimension_numbers<[1], [0], [0], [1], [0, 0, 1, 1], [], []>} : vector<64x16xf32>, vector<16x128xf32>, vector<64x128xf32> -> vector<64x128xf32>
    %4 = vector.broadcast %1 : vector<1x128xf32> to vector<64x128xf32>
    %5 = arith.addf %3, %4 : vector<64x128xf32>
    %c16 = arith.constant 16 : index
    %c0_4 = arith.constant 0 : index
    %6 = vector.load %arg1[%c16, %c0_4] : memref<128x256xf32, #tpu.memory_space<vmem>>, vector<32x256xf32>
    %c48 = arith.constant 48 : index
    %c0_5 = arith.constant 0 : index
    %7 = vector.load %arg1[%c48, %c0_5] : memref<128x256xf32, #tpu.memory_space<vmem>>, vector<32x128xf32>
    %c112_6 = arith.constant 112 : index
    %c128 = arith.constant 128 : index
    %8 = vector.load %arg1[%c112_6, %c128] : memref<128x256xf32, #tpu.memory_space<vmem>>, vector<1x128xf32>
    %9 = vector.shape_cast %8 : vector<1x128xf32> to vector<1x128xf32>
    %10 = vector.broadcast %9 : vector<1x128xf32> to vector<8x128xf32>
    %cst_7 = arith.constant 0.000000e+00 : f32
    %11 = vector.broadcast %cst_7 : f32 to vector<8x32xf32>
    %cst_8 = arith.constant 0.000000e+00 : f32
    %12 = vector.broadcast %cst_8 : f32 to vector<8x128xf32>
    %13 = vector.extract_strided_slice %5 {offsets = [0, 0], sizes = [8, 128], strides = [1, 1]} : vector<64x128xf32> to vector<8x128xf32>
    %14 = arith.addf %13, %12 : vector<8x128xf32>
    %15 = arith.negf %14 : vector<8x128xf32>
    %16 = math.exp %15 : vector<8x128xf32>
    %cst_9 = arith.constant 1.000000e+00 : f32
    %17 = vector.broadcast %cst_9 : f32 to vector<8x128xf32>
    %18 = arith.addf %17, %16 : vector<8x128xf32>
    %19 = arith.divf %17, %18 : vector<8x128xf32>
    %20 = math.tanh %14 : vector<8x128xf32>
    %21 = vector.extract_strided_slice %19 {offsets = [0, 0], sizes = [8, 32], strides = [1, 1]} : vector<8x128xf32> to vector<8x32xf32>
    %22 = vector.extract_strided_slice %19 {offsets = [0, 32], sizes = [8, 32], strides = [1, 1]} : vector<8x128xf32> to vector<8x32xf32>
    %23 = vector.extract_strided_slice %20 {offsets = [0, 64], sizes = [8, 32], strides = [1, 1]} : vector<8x128xf32> to vector<8x32xf32>
    %24 = vector.extract_strided_slice %19 {offsets = [0, 96], sizes = [8, 32], strides = [1, 1]} : vector<8x128xf32> to vector<8x32xf32>
    %25 = arith.mulf %22, %11 : vector<8x32xf32>
    %26 = arith.mulf %21, %23 : vector<8x32xf32>
    %27 = arith.addf %25, %26 : vector<8x32xf32>
    %28 = math.tanh %27 : vector<8x32xf32>
    %29 = arith.mulf %24, %28 : vector<8x32xf32>
    %cst_10 = arith.constant dense<0.000000e+00> : vector<8x256xf32>
    %30 = tpu.matmul %29, %6, %cst_10 {dimension_numbers = #tpu.dot_dimension_numbers<[1], [0], [0], [1], [0, 0, 1, 1], [], []>} : vector<8x32xf32>, vector<32x256xf32>, vector<8x256xf32> -> vector<8x256xf32>
    %31 = vector.extract_strided_slice %30 {offsets = [0, 0], sizes = [8, 128], strides = [1, 1]} : vector<8x256xf32> to vector<8x128xf32>
    %32 = vector.extract_strided_slice %30 {offsets = [0, 128], sizes = [8, 128], strides = [1, 1]} : vector<8x256xf32> to vector<8x128xf32>
    %33 = arith.addf %32, %10 : vector<8x128xf32>
    %cst_11 = arith.constant dense<0.000000e+00> : vector<8x128xf32>
    %34 = tpu.matmul %11, %7, %cst_11 {dimension_numbers = #tpu.dot_dimension_numbers<[1], [0], [0], [1], [0, 0, 1, 1], [], []>} : vector<8x32xf32>, vector<32x128xf32>, vector<8x128xf32> -> vector<8x128xf32>
    %35 = arith.addf %33, %34 : vector<8x128xf32>
    %36 = arith.negf %35 : vector<8x128xf32>
    %37 = math.exp %36 : vector<8x128xf32>
    %cst_12 = arith.constant 1.000000e+00 : f32
    %38 = vector.broadcast %cst_12 : f32 to vector<8x128xf32>
    %39 = arith.addf %38, %37 : vector<8x128xf32>
    %40 = arith.divf %38, %39 : vector<8x128xf32>
    %41 = math.tanh %35 : vector<8x128xf32>
    %42 = vector.extract_strided_slice %40 {offsets = [0, 0], sizes = [8, 32], strides = [1, 1]} : vector<8x128xf32> to vector<8x32xf32>
    %43 = vector.extract_strided_slice %40 {offsets = [0, 32], sizes = [8, 32], strides = [1, 1]} : vector<8x128xf32> to vector<8x32xf32>
    %44 = vector.extract_strided_slice %41 {offsets = [0, 64], sizes = [8, 32], strides = [1, 1]} : vector<8x128xf32> to vector<8x32xf32>
    %45 = vector.extract_strided_slice %40 {offsets = [0, 96], sizes = [8, 32], strides = [1, 1]} : vector<8x128xf32> to vector<8x32xf32>
    %46 = arith.mulf %43, %11 : vector<8x32xf32>
    %47 = arith.mulf %42, %44 : vector<8x32xf32>
    %48 = arith.addf %46, %47 : vector<8x32xf32>
    %49 = math.tanh %48 : vector<8x32xf32>
    %50 = arith.mulf %45, %49 : vector<8x32xf32>
    %51 = vector.extract_strided_slice %5 {offsets = [8, 0], sizes = [8, 128], strides = [1, 1]} : vector<64x128xf32> to vector<8x128xf32>
    %52 = arith.addf %51, %31 : vector<8x128xf32>
    %53 = arith.negf %52 : vector<8x128xf32>
    %54 = math.exp %53 : vector<8x128xf32>
    %cst_13 = arith.constant 1.000000e+00 : f32
    %55 = vector.broadcast %cst_13 : f32 to vector<8x128xf32>
    %56 = arith.addf %55, %54 : vector<8x128xf32>
    %57 = arith.divf %55, %56 : vector<8x128xf32>
    %58 = math.tanh %52 : vector<8x128xf32>
    %59 = vector.extract_strided_slice %57 {offsets = [0, 0], sizes = [8, 32], strides = [1, 1]} : vector<8x128xf32> to vector<8x32xf32>
    %60 = vector.extract_strided_slice %57 {offsets = [0, 32], sizes = [8, 32], strides = [1, 1]} : vector<8x128xf32> to vector<8x32xf32>
    %61 = vector.extract_strided_slice %58 {offsets = [0, 64], sizes = [8, 32], strides = [1, 1]} : vector<8x128xf32> to vector<8x32xf32>
    %62 = vector.extract_strided_slice %57 {offsets = [0, 96], sizes = [8, 32], strides = [1, 1]} : vector<8x128xf32> to vector<8x32xf32>
    %63 = arith.mulf %60, %27 : vector<8x32xf32>
    %64 = arith.mulf %59, %61 : vector<8x32xf32>
    %65 = arith.addf %63, %64 : vector<8x32xf32>
    %66 = math.tanh %65 : vector<8x32xf32>
    %67 = arith.mulf %62, %66 : vector<8x32xf32>
    %cst_14 = arith.constant dense<0.000000e+00> : vector<8x256xf32>
    %68 = tpu.matmul %67, %6, %cst_14 {dimension_numbers = #tpu.dot_dimension_numbers<[1], [0], [0], [1], [0, 0, 1, 1], [], []>} : vector<8x32xf32>, vector<32x256xf32>, vector<8x256xf32> -> vector<8x256xf32>
    %69 = vector.extract_strided_slice %68 {offsets = [0, 0], sizes = [8, 128], strides = [1, 1]} : vector<8x256xf32> to vector<8x128xf32>
    %70 = vector.extract_strided_slice %68 {offsets = [0, 128], sizes = [8, 128], strides = [1, 1]} : vector<8x256xf32> to vector<8x128xf32>
    %71 = arith.addf %70, %10 : vector<8x128xf32>
    %cst_15 = arith.constant dense<0.000000e+00> : vector<8x128xf32>
    %72 = tpu.matmul %50, %7, %cst_15 {dimension_numbers = #tpu.dot_dimension_numbers<[1], [0], [0], [1], [0, 0, 1, 1], [], []>} : vector<8x32xf32>, vector<32x128xf32>, vector<8x128xf32> -> vector<8x128xf32>
    %73 = arith.addf %71, %72 : vector<8x128xf32>
    %74 = arith.negf %73 : vector<8x128xf32>
    %75 = math.exp %74 : vector<8x128xf32>
    %cst_16 = arith.constant 1.000000e+00 : f32
    %76 = vector.broadcast %cst_16 : f32 to vector<8x128xf32>
    %77 = arith.addf %76, %75 : vector<8x128xf32>
    %78 = arith.divf %76, %77 : vector<8x128xf32>
    %79 = math.tanh %73 : vector<8x128xf32>
    %80 = vector.extract_strided_slice %78 {offsets = [0, 0], sizes = [8, 32], strides = [1, 1]} : vector<8x128xf32> to vector<8x32xf32>
    %81 = vector.extract_strided_slice %78 {offsets = [0, 32], sizes = [8, 32], strides = [1, 1]} : vector<8x128xf32> to vector<8x32xf32>
    %82 = vector.extract_strided_slice %79 {offsets = [0, 64], sizes = [8, 32], strides = [1, 1]} : vector<8x128xf32> to vector<8x32xf32>
    %83 = vector.extract_strided_slice %78 {offsets = [0, 96], sizes = [8, 32], strides = [1, 1]} : vector<8x128xf32> to vector<8x32xf32>
    %84 = arith.mulf %81, %48 : vector<8x32xf32>
    %85 = arith.mulf %80, %82 : vector<8x32xf32>
    %86 = arith.addf %84, %85 : vector<8x32xf32>
    %87 = math.tanh %86 : vector<8x32xf32>
    %88 = arith.mulf %83, %87 : vector<8x32xf32>
    %89 = vector.extract_strided_slice %5 {offsets = [16, 0], sizes = [8, 128], strides = [1, 1]} : vector<64x128xf32> to vector<8x128xf32>
    %90 = arith.addf %89, %69 : vector<8x128xf32>
    %91 = arith.negf %90 : vector<8x128xf32>
    %92 = math.exp %91 : vector<8x128xf32>
    %cst_17 = arith.constant 1.000000e+00 : f32
    %93 = vector.broadcast %cst_17 : f32 to vector<8x128xf32>
    %94 = arith.addf %93, %92 : vector<8x128xf32>
    %95 = arith.divf %93, %94 : vector<8x128xf32>
    %96 = math.tanh %90 : vector<8x128xf32>
    %97 = vector.extract_strided_slice %95 {offsets = [0, 0], sizes = [8, 32], strides = [1, 1]} : vector<8x128xf32> to vector<8x32xf32>
    %98 = vector.extract_strided_slice %95 {offsets = [0, 32], sizes = [8, 32], strides = [1, 1]} : vector<8x128xf32> to vector<8x32xf32>
    %99 = vector.extract_strided_slice %96 {offsets = [0, 64], sizes = [8, 32], strides = [1, 1]} : vector<8x128xf32> to vector<8x32xf32>
    %100 = vector.extract_strided_slice %95 {offsets = [0, 96], sizes = [8, 32], strides = [1, 1]} : vector<8x128xf32> to vector<8x32xf32>
    %101 = arith.mulf %98, %65 : vector<8x32xf32>
    %102 = arith.mulf %97, %99 : vector<8x32xf32>
    %103 = arith.addf %101, %102 : vector<8x32xf32>
    %104 = math.tanh %103 : vector<8x32xf32>
    %105 = arith.mulf %100, %104 : vector<8x32xf32>
    %cst_18 = arith.constant dense<0.000000e+00> : vector<8x256xf32>
    %106 = tpu.matmul %105, %6, %cst_18 {dimension_numbers = #tpu.dot_dimension_numbers<[1], [0], [0], [1], [0, 0, 1, 1], [], []>} : vector<8x32xf32>, vector<32x256xf32>, vector<8x256xf32> -> vector<8x256xf32>
    %107 = vector.extract_strided_slice %106 {offsets = [0, 0], sizes = [8, 128], strides = [1, 1]} : vector<8x256xf32> to vector<8x128xf32>
    %108 = vector.extract_strided_slice %106 {offsets = [0, 128], sizes = [8, 128], strides = [1, 1]} : vector<8x256xf32> to vector<8x128xf32>
    %109 = arith.addf %108, %10 : vector<8x128xf32>
    %cst_19 = arith.constant dense<0.000000e+00> : vector<8x128xf32>
    %110 = tpu.matmul %88, %7, %cst_19 {dimension_numbers = #tpu.dot_dimension_numbers<[1], [0], [0], [1], [0, 0, 1, 1], [], []>} : vector<8x32xf32>, vector<32x128xf32>, vector<8x128xf32> -> vector<8x128xf32>
    %111 = arith.addf %109, %110 : vector<8x128xf32>
    %112 = arith.negf %111 : vector<8x128xf32>
    %113 = math.exp %112 : vector<8x128xf32>
    %cst_20 = arith.constant 1.000000e+00 : f32
    %114 = vector.broadcast %cst_20 : f32 to vector<8x128xf32>
    %115 = arith.addf %114, %113 : vector<8x128xf32>
    %116 = arith.divf %114, %115 : vector<8x128xf32>
    %117 = math.tanh %111 : vector<8x128xf32>
    %118 = vector.extract_strided_slice %116 {offsets = [0, 0], sizes = [8, 32], strides = [1, 1]} : vector<8x128xf32> to vector<8x32xf32>
    %119 = vector.extract_strided_slice %116 {offsets = [0, 32], sizes = [8, 32], strides = [1, 1]} : vector<8x128xf32> to vector<8x32xf32>
    %120 = vector.extract_strided_slice %117 {offsets = [0, 64], sizes = [8, 32], strides = [1, 1]} : vector<8x128xf32> to vector<8x32xf32>
    %121 = vector.extract_strided_slice %116 {offsets = [0, 96], sizes = [8, 32], strides = [1, 1]} : vector<8x128xf32> to vector<8x32xf32>
    %122 = arith.mulf %119, %86 : vector<8x32xf32>
    %123 = arith.mulf %118, %120 : vector<8x32xf32>
    %124 = arith.addf %122, %123 : vector<8x32xf32>
    %125 = math.tanh %124 : vector<8x32xf32>
    %126 = arith.mulf %121, %125 : vector<8x32xf32>
    %127 = vector.extract_strided_slice %5 {offsets = [24, 0], sizes = [8, 128], strides = [1, 1]} : vector<64x128xf32> to vector<8x128xf32>
    %128 = arith.addf %127, %107 : vector<8x128xf32>
    %129 = arith.negf %128 : vector<8x128xf32>
    %130 = math.exp %129 : vector<8x128xf32>
    %cst_21 = arith.constant 1.000000e+00 : f32
    %131 = vector.broadcast %cst_21 : f32 to vector<8x128xf32>
    %132 = arith.addf %131, %130 : vector<8x128xf32>
    %133 = arith.divf %131, %132 : vector<8x128xf32>
    %134 = math.tanh %128 : vector<8x128xf32>
    %135 = vector.extract_strided_slice %133 {offsets = [0, 0], sizes = [8, 32], strides = [1, 1]} : vector<8x128xf32> to vector<8x32xf32>
    %136 = vector.extract_strided_slice %133 {offsets = [0, 32], sizes = [8, 32], strides = [1, 1]} : vector<8x128xf32> to vector<8x32xf32>
    %137 = vector.extract_strided_slice %134 {offsets = [0, 64], sizes = [8, 32], strides = [1, 1]} : vector<8x128xf32> to vector<8x32xf32>
    %138 = vector.extract_strided_slice %133 {offsets = [0, 96], sizes = [8, 32], strides = [1, 1]} : vector<8x128xf32> to vector<8x32xf32>
    %139 = arith.mulf %136, %103 : vector<8x32xf32>
    %140 = arith.mulf %135, %137 : vector<8x32xf32>
    %141 = arith.addf %139, %140 : vector<8x32xf32>
    %142 = math.tanh %141 : vector<8x32xf32>
    %143 = arith.mulf %138, %142 : vector<8x32xf32>
    %cst_22 = arith.constant dense<0.000000e+00> : vector<8x256xf32>
    %144 = tpu.matmul %143, %6, %cst_22 {dimension_numbers = #tpu.dot_dimension_numbers<[1], [0], [0], [1], [0, 0, 1, 1], [], []>} : vector<8x32xf32>, vector<32x256xf32>, vector<8x256xf32> -> vector<8x256xf32>
    %145 = vector.extract_strided_slice %144 {offsets = [0, 0], sizes = [8, 128], strides = [1, 1]} : vector<8x256xf32> to vector<8x128xf32>
    %146 = vector.extract_strided_slice %144 {offsets = [0, 128], sizes = [8, 128], strides = [1, 1]} : vector<8x256xf32> to vector<8x128xf32>
    %147 = arith.addf %146, %10 : vector<8x128xf32>
    %cst_23 = arith.constant dense<0.000000e+00> : vector<8x128xf32>
    %148 = tpu.matmul %126, %7, %cst_23 {dimension_numbers = #tpu.dot_dimension_numbers<[1], [0], [0], [1], [0, 0, 1, 1], [], []>} : vector<8x32xf32>, vector<32x128xf32>, vector<8x128xf32> -> vector<8x128xf32>
    %149 = arith.addf %147, %148 : vector<8x128xf32>
    %150 = arith.negf %149 : vector<8x128xf32>
    %151 = math.exp %150 : vector<8x128xf32>
    %cst_24 = arith.constant 1.000000e+00 : f32
    %152 = vector.broadcast %cst_24 : f32 to vector<8x128xf32>
    %153 = arith.addf %152, %151 : vector<8x128xf32>
    %154 = arith.divf %152, %153 : vector<8x128xf32>
    %155 = math.tanh %149 : vector<8x128xf32>
    %156 = vector.extract_strided_slice %154 {offsets = [0, 0], sizes = [8, 32], strides = [1, 1]} : vector<8x128xf32> to vector<8x32xf32>
    %157 = vector.extract_strided_slice %154 {offsets = [0, 32], sizes = [8, 32], strides = [1, 1]} : vector<8x128xf32> to vector<8x32xf32>
    %158 = vector.extract_strided_slice %155 {offsets = [0, 64], sizes = [8, 32], strides = [1, 1]} : vector<8x128xf32> to vector<8x32xf32>
    %159 = vector.extract_strided_slice %154 {offsets = [0, 96], sizes = [8, 32], strides = [1, 1]} : vector<8x128xf32> to vector<8x32xf32>
    %160 = arith.mulf %157, %124 : vector<8x32xf32>
    %161 = arith.mulf %156, %158 : vector<8x32xf32>
    %162 = arith.addf %160, %161 : vector<8x32xf32>
    %163 = math.tanh %162 : vector<8x32xf32>
    %164 = arith.mulf %159, %163 : vector<8x32xf32>
    %165 = vector.extract_strided_slice %5 {offsets = [32, 0], sizes = [8, 128], strides = [1, 1]} : vector<64x128xf32> to vector<8x128xf32>
    %166 = arith.addf %165, %145 : vector<8x128xf32>
    %167 = arith.negf %166 : vector<8x128xf32>
    %168 = math.exp %167 : vector<8x128xf32>
    %cst_25 = arith.constant 1.000000e+00 : f32
    %169 = vector.broadcast %cst_25 : f32 to vector<8x128xf32>
    %170 = arith.addf %169, %168 : vector<8x128xf32>
    %171 = arith.divf %169, %170 : vector<8x128xf32>
    %172 = math.tanh %166 : vector<8x128xf32>
    %173 = vector.extract_strided_slice %171 {offsets = [0, 0], sizes = [8, 32], strides = [1, 1]} : vector<8x128xf32> to vector<8x32xf32>
    %174 = vector.extract_strided_slice %171 {offsets = [0, 32], sizes = [8, 32], strides = [1, 1]} : vector<8x128xf32> to vector<8x32xf32>
    %175 = vector.extract_strided_slice %172 {offsets = [0, 64], sizes = [8, 32], strides = [1, 1]} : vector<8x128xf32> to vector<8x32xf32>
    %176 = vector.extract_strided_slice %171 {offsets = [0, 96], sizes = [8, 32], strides = [1, 1]} : vector<8x128xf32> to vector<8x32xf32>
    %177 = arith.mulf %174, %141 : vector<8x32xf32>
    %178 = arith.mulf %173, %175 : vector<8x32xf32>
    %179 = arith.addf %177, %178 : vector<8x32xf32>
    %180 = math.tanh %179 : vector<8x32xf32>
    %181 = arith.mulf %176, %180 : vector<8x32xf32>
    %cst_26 = arith.constant dense<0.000000e+00> : vector<8x256xf32>
    %182 = tpu.matmul %181, %6, %cst_26 {dimension_numbers = #tpu.dot_dimension_numbers<[1], [0], [0], [1], [0, 0, 1, 1], [], []>} : vector<8x32xf32>, vector<32x256xf32>, vector<8x256xf32> -> vector<8x256xf32>
    %183 = vector.extract_strided_slice %182 {offsets = [0, 0], sizes = [8, 128], strides = [1, 1]} : vector<8x256xf32> to vector<8x128xf32>
    %184 = vector.extract_strided_slice %182 {offsets = [0, 128], sizes = [8, 128], strides = [1, 1]} : vector<8x256xf32> to vector<8x128xf32>
    %185 = arith.addf %184, %10 : vector<8x128xf32>
    %cst_27 = arith.constant dense<0.000000e+00> : vector<8x128xf32>
    %186 = tpu.matmul %164, %7, %cst_27 {dimension_numbers = #tpu.dot_dimension_numbers<[1], [0], [0], [1], [0, 0, 1, 1], [], []>} : vector<8x32xf32>, vector<32x128xf32>, vector<8x128xf32> -> vector<8x128xf32>
    %187 = arith.addf %185, %186 : vector<8x128xf32>
    %188 = arith.negf %187 : vector<8x128xf32>
    %189 = math.exp %188 : vector<8x128xf32>
    %cst_28 = arith.constant 1.000000e+00 : f32
    %190 = vector.broadcast %cst_28 : f32 to vector<8x128xf32>
    %191 = arith.addf %190, %189 : vector<8x128xf32>
    %192 = arith.divf %190, %191 : vector<8x128xf32>
    %193 = math.tanh %187 : vector<8x128xf32>
    %194 = vector.extract_strided_slice %192 {offsets = [0, 0], sizes = [8, 32], strides = [1, 1]} : vector<8x128xf32> to vector<8x32xf32>
    %195 = vector.extract_strided_slice %192 {offsets = [0, 32], sizes = [8, 32], strides = [1, 1]} : vector<8x128xf32> to vector<8x32xf32>
    %196 = vector.extract_strided_slice %193 {offsets = [0, 64], sizes = [8, 32], strides = [1, 1]} : vector<8x128xf32> to vector<8x32xf32>
    %197 = vector.extract_strided_slice %192 {offsets = [0, 96], sizes = [8, 32], strides = [1, 1]} : vector<8x128xf32> to vector<8x32xf32>
    %198 = arith.mulf %195, %162 : vector<8x32xf32>
    %199 = arith.mulf %194, %196 : vector<8x32xf32>
    %200 = arith.addf %198, %199 : vector<8x32xf32>
    %201 = math.tanh %200 : vector<8x32xf32>
    %202 = arith.mulf %197, %201 : vector<8x32xf32>
    %203 = vector.extract_strided_slice %5 {offsets = [40, 0], sizes = [8, 128], strides = [1, 1]} : vector<64x128xf32> to vector<8x128xf32>
    %204 = arith.addf %203, %183 : vector<8x128xf32>
    %205 = arith.negf %204 : vector<8x128xf32>
    %206 = math.exp %205 : vector<8x128xf32>
    %cst_29 = arith.constant 1.000000e+00 : f32
    %207 = vector.broadcast %cst_29 : f32 to vector<8x128xf32>
    %208 = arith.addf %207, %206 : vector<8x128xf32>
    %209 = arith.divf %207, %208 : vector<8x128xf32>
    %210 = math.tanh %204 : vector<8x128xf32>
    %211 = vector.extract_strided_slice %209 {offsets = [0, 0], sizes = [8, 32], strides = [1, 1]} : vector<8x128xf32> to vector<8x32xf32>
    %212 = vector.extract_strided_slice %209 {offsets = [0, 32], sizes = [8, 32], strides = [1, 1]} : vector<8x128xf32> to vector<8x32xf32>
    %213 = vector.extract_strided_slice %210 {offsets = [0, 64], sizes = [8, 32], strides = [1, 1]} : vector<8x128xf32> to vector<8x32xf32>
    %214 = vector.extract_strided_slice %209 {offsets = [0, 96], sizes = [8, 32], strides = [1, 1]} : vector<8x128xf32> to vector<8x32xf32>
    %215 = arith.mulf %212, %179 : vector<8x32xf32>
    %216 = arith.mulf %211, %213 : vector<8x32xf32>
    %217 = arith.addf %215, %216 : vector<8x32xf32>
    %218 = math.tanh %217 : vector<8x32xf32>
    %219 = arith.mulf %214, %218 : vector<8x32xf32>
    %cst_30 = arith.constant dense<0.000000e+00> : vector<8x256xf32>
    %220 = tpu.matmul %219, %6, %cst_30 {dimension_numbers = #tpu.dot_dimension_numbers<[1], [0], [0], [1], [0, 0, 1, 1], [], []>} : vector<8x32xf32>, vector<32x256xf32>, vector<8x256xf32> -> vector<8x256xf32>
    %221 = vector.extract_strided_slice %220 {offsets = [0, 0], sizes = [8, 128], strides = [1, 1]} : vector<8x256xf32> to vector<8x128xf32>
    %222 = vector.extract_strided_slice %220 {offsets = [0, 128], sizes = [8, 128], strides = [1, 1]} : vector<8x256xf32> to vector<8x128xf32>
    %223 = arith.addf %222, %10 : vector<8x128xf32>
    %cst_31 = arith.constant dense<0.000000e+00> : vector<8x128xf32>
    %224 = tpu.matmul %202, %7, %cst_31 {dimension_numbers = #tpu.dot_dimension_numbers<[1], [0], [0], [1], [0, 0, 1, 1], [], []>} : vector<8x32xf32>, vector<32x128xf32>, vector<8x128xf32> -> vector<8x128xf32>
    %225 = arith.addf %223, %224 : vector<8x128xf32>
    %226 = arith.negf %225 : vector<8x128xf32>
    %227 = math.exp %226 : vector<8x128xf32>
    %cst_32 = arith.constant 1.000000e+00 : f32
    %228 = vector.broadcast %cst_32 : f32 to vector<8x128xf32>
    %229 = arith.addf %228, %227 : vector<8x128xf32>
    %230 = arith.divf %228, %229 : vector<8x128xf32>
    %231 = math.tanh %225 : vector<8x128xf32>
    %232 = vector.extract_strided_slice %230 {offsets = [0, 0], sizes = [8, 32], strides = [1, 1]} : vector<8x128xf32> to vector<8x32xf32>
    %233 = vector.extract_strided_slice %230 {offsets = [0, 32], sizes = [8, 32], strides = [1, 1]} : vector<8x128xf32> to vector<8x32xf32>
    %234 = vector.extract_strided_slice %231 {offsets = [0, 64], sizes = [8, 32], strides = [1, 1]} : vector<8x128xf32> to vector<8x32xf32>
    %235 = vector.extract_strided_slice %230 {offsets = [0, 96], sizes = [8, 32], strides = [1, 1]} : vector<8x128xf32> to vector<8x32xf32>
    %236 = arith.mulf %233, %200 : vector<8x32xf32>
    %237 = arith.mulf %232, %234 : vector<8x32xf32>
    %238 = arith.addf %236, %237 : vector<8x32xf32>
    %239 = math.tanh %238 : vector<8x32xf32>
    %240 = arith.mulf %235, %239 : vector<8x32xf32>
    %241 = vector.extract_strided_slice %5 {offsets = [48, 0], sizes = [8, 128], strides = [1, 1]} : vector<64x128xf32> to vector<8x128xf32>
    %242 = arith.addf %241, %221 : vector<8x128xf32>
    %243 = arith.negf %242 : vector<8x128xf32>
    %244 = math.exp %243 : vector<8x128xf32>
    %cst_33 = arith.constant 1.000000e+00 : f32
    %245 = vector.broadcast %cst_33 : f32 to vector<8x128xf32>
    %246 = arith.addf %245, %244 : vector<8x128xf32>
    %247 = arith.divf %245, %246 : vector<8x128xf32>
    %248 = math.tanh %242 : vector<8x128xf32>
    %249 = vector.extract_strided_slice %247 {offsets = [0, 0], sizes = [8, 32], strides = [1, 1]} : vector<8x128xf32> to vector<8x32xf32>
    %250 = vector.extract_strided_slice %247 {offsets = [0, 32], sizes = [8, 32], strides = [1, 1]} : vector<8x128xf32> to vector<8x32xf32>
    %251 = vector.extract_strided_slice %248 {offsets = [0, 64], sizes = [8, 32], strides = [1, 1]} : vector<8x128xf32> to vector<8x32xf32>
    %252 = vector.extract_strided_slice %247 {offsets = [0, 96], sizes = [8, 32], strides = [1, 1]} : vector<8x128xf32> to vector<8x32xf32>
    %253 = arith.mulf %250, %217 : vector<8x32xf32>
    %254 = arith.mulf %249, %251 : vector<8x32xf32>
    %255 = arith.addf %253, %254 : vector<8x32xf32>
    %256 = math.tanh %255 : vector<8x32xf32>
    %257 = arith.mulf %252, %256 : vector<8x32xf32>
    %cst_34 = arith.constant dense<0.000000e+00> : vector<8x256xf32>
    %258 = tpu.matmul %257, %6, %cst_34 {dimension_numbers = #tpu.dot_dimension_numbers<[1], [0], [0], [1], [0, 0, 1, 1], [], []>} : vector<8x32xf32>, vector<32x256xf32>, vector<8x256xf32> -> vector<8x256xf32>
    %259 = vector.extract_strided_slice %258 {offsets = [0, 0], sizes = [8, 128], strides = [1, 1]} : vector<8x256xf32> to vector<8x128xf32>
    %260 = vector.extract_strided_slice %258 {offsets = [0, 128], sizes = [8, 128], strides = [1, 1]} : vector<8x256xf32> to vector<8x128xf32>
    %261 = arith.addf %260, %10 : vector<8x128xf32>
    %cst_35 = arith.constant dense<0.000000e+00> : vector<8x128xf32>
    %262 = tpu.matmul %240, %7, %cst_35 {dimension_numbers = #tpu.dot_dimension_numbers<[1], [0], [0], [1], [0, 0, 1, 1], [], []>} : vector<8x32xf32>, vector<32x128xf32>, vector<8x128xf32> -> vector<8x128xf32>
    %263 = arith.addf %261, %262 : vector<8x128xf32>
    %264 = arith.negf %263 : vector<8x128xf32>
    %265 = math.exp %264 : vector<8x128xf32>
    %cst_36 = arith.constant 1.000000e+00 : f32
    %266 = vector.broadcast %cst_36 : f32 to vector<8x128xf32>
    %267 = arith.addf %266, %265 : vector<8x128xf32>
    %268 = arith.divf %266, %267 : vector<8x128xf32>
    %269 = math.tanh %263 : vector<8x128xf32>
    %270 = vector.extract_strided_slice %268 {offsets = [0, 0], sizes = [8, 32], strides = [1, 1]} : vector<8x128xf32> to vector<8x32xf32>
    %271 = vector.extract_strided_slice %268 {offsets = [0, 32], sizes = [8, 32], strides = [1, 1]} : vector<8x128xf32> to vector<8x32xf32>
    %272 = vector.extract_strided_slice %269 {offsets = [0, 64], sizes = [8, 32], strides = [1, 1]} : vector<8x128xf32> to vector<8x32xf32>
    %273 = vector.extract_strided_slice %268 {offsets = [0, 96], sizes = [8, 32], strides = [1, 1]} : vector<8x128xf32> to vector<8x32xf32>
    %274 = arith.mulf %271, %238 : vector<8x32xf32>
    %275 = arith.mulf %270, %272 : vector<8x32xf32>
    %276 = arith.addf %274, %275 : vector<8x32xf32>
    %277 = math.tanh %276 : vector<8x32xf32>
    %278 = arith.mulf %273, %277 : vector<8x32xf32>
    %279 = vector.extract_strided_slice %5 {offsets = [56, 0], sizes = [8, 128], strides = [1, 1]} : vector<64x128xf32> to vector<8x128xf32>
    %280 = arith.addf %279, %259 : vector<8x128xf32>
    %281 = arith.negf %280 : vector<8x128xf32>
    %282 = math.exp %281 : vector<8x128xf32>
    %cst_37 = arith.constant 1.000000e+00 : f32
    %283 = vector.broadcast %cst_37 : f32 to vector<8x128xf32>
    %284 = arith.addf %283, %282 : vector<8x128xf32>
    %285 = arith.divf %283, %284 : vector<8x128xf32>
    %286 = math.tanh %280 : vector<8x128xf32>
    %287 = vector.extract_strided_slice %285 {offsets = [0, 0], sizes = [8, 32], strides = [1, 1]} : vector<8x128xf32> to vector<8x32xf32>
    %288 = vector.extract_strided_slice %285 {offsets = [0, 32], sizes = [8, 32], strides = [1, 1]} : vector<8x128xf32> to vector<8x32xf32>
    %289 = vector.extract_strided_slice %286 {offsets = [0, 64], sizes = [8, 32], strides = [1, 1]} : vector<8x128xf32> to vector<8x32xf32>
    %290 = vector.extract_strided_slice %285 {offsets = [0, 96], sizes = [8, 32], strides = [1, 1]} : vector<8x128xf32> to vector<8x32xf32>
    %291 = arith.mulf %288, %255 : vector<8x32xf32>
    %292 = arith.mulf %287, %289 : vector<8x32xf32>
    %293 = arith.addf %291, %292 : vector<8x32xf32>
    %294 = math.tanh %293 : vector<8x32xf32>
    %295 = arith.mulf %290, %294 : vector<8x32xf32>
    %cst_38 = arith.constant dense<0.000000e+00> : vector<8x256xf32>
    %296 = tpu.matmul %295, %6, %cst_38 {dimension_numbers = #tpu.dot_dimension_numbers<[1], [0], [0], [1], [0, 0, 1, 1], [], []>} : vector<8x32xf32>, vector<32x256xf32>, vector<8x256xf32> -> vector<8x256xf32>
    %297 = vector.extract_strided_slice %296 {offsets = [0, 128], sizes = [8, 128], strides = [1, 1]} : vector<8x256xf32> to vector<8x128xf32>
    %298 = arith.addf %297, %10 : vector<8x128xf32>
    %cst_39 = arith.constant dense<0.000000e+00> : vector<8x128xf32>
    %299 = tpu.matmul %278, %7, %cst_39 {dimension_numbers = #tpu.dot_dimension_numbers<[1], [0], [0], [1], [0, 0, 1, 1], [], []>} : vector<8x32xf32>, vector<32x128xf32>, vector<8x128xf32> -> vector<8x128xf32>
    %300 = arith.addf %298, %299 : vector<8x128xf32>
    %301 = arith.negf %300 : vector<8x128xf32>
    %302 = math.exp %301 : vector<8x128xf32>
    %cst_40 = arith.constant 1.000000e+00 : f32
    %303 = vector.broadcast %cst_40 : f32 to vector<8x128xf32>
    %304 = arith.addf %303, %302 : vector<8x128xf32>
    %305 = arith.divf %303, %304 : vector<8x128xf32>
    %306 = math.tanh %300 : vector<8x128xf32>
    %307 = vector.extract_strided_slice %305 {offsets = [0, 0], sizes = [8, 32], strides = [1, 1]} : vector<8x128xf32> to vector<8x32xf32>
    %308 = vector.extract_strided_slice %305 {offsets = [0, 32], sizes = [8, 32], strides = [1, 1]} : vector<8x128xf32> to vector<8x32xf32>
    %309 = vector.extract_strided_slice %306 {offsets = [0, 64], sizes = [8, 32], strides = [1, 1]} : vector<8x128xf32> to vector<8x32xf32>
    %310 = vector.extract_strided_slice %305 {offsets = [0, 96], sizes = [8, 32], strides = [1, 1]} : vector<8x128xf32> to vector<8x32xf32>
    %311 = arith.mulf %308, %276 : vector<8x32xf32>
    %312 = arith.mulf %307, %309 : vector<8x32xf32>
    %313 = arith.addf %311, %312 : vector<8x32xf32>
    %314 = math.tanh %313 : vector<8x32xf32>
    %315 = arith.mulf %310, %314 : vector<8x32xf32>
    %c80 = arith.constant 80 : index
    %c0_41 = arith.constant 0 : index
    %316 = vector.load %arg1[%c80, %c0_41] : memref<128x256xf32, #tpu.memory_space<vmem>>, vector<32x128xf32>
    %c120 = arith.constant 120 : index
    %c0_42 = arith.constant 0 : index
    %317 = vector.load %arg1[%c120, %c0_42] : memref<128x256xf32, #tpu.memory_space<vmem>>, vector<1x128xf32>
    %cst_43 = arith.constant dense<0.000000e+00> : vector<8x128xf32>
    %318 = tpu.matmul %315, %316, %cst_43 {dimension_numbers = #tpu.dot_dimension_numbers<[1], [0], [0], [1], [0, 0, 1, 1], [], []>} : vector<8x32xf32>, vector<32x128xf32>, vector<8x128xf32> -> vector<8x128xf32>
    %319 = vector.broadcast %317 : vector<1x128xf32> to vector<8x128xf32>
    %320 = arith.addf %318, %319 : vector<8x128xf32>
    %c0_44 = arith.constant 0 : index
    %c0_45 = arith.constant 0 : index
    %321 = vector.load %arg2[%c0_44, %c0_45] : memref<8x128xf32, #tpu.memory_space<vmem>>, vector<8x128xf32>
    tpu.vector_store %arg2[%c0_44, %c0_45], %320 {strides = array<i32>} : memref<8x128xf32, #tpu.memory_space<vmem>>, vector<8x128xf32>,
    return
  }
}

</mosaic_0001>

<llo_original>
// kernel: tpu_custom_call.1
$region0: #{tpu_custom_call.1}
  #allocation0 [shape = 'u32[]', space=smem, size = 0x4, offset = 0x4, fixed_abs, tag = 'smem constant byte address 0x4 - core index']
  #allocation1 [shape = 'u32[72,128]{1,0:T(1,128)}', space=vmem, size = 0x9000, scoped, tag = 'internal scratch']
  %s0 = inlined_call_operand.vmem [shape: f32[64,16], index: 0, kind: input, shape index: {}]
  %s1 = inlined_call_operand.hbm [shape: f32[128,256], index: 1, kind: input, shape index: {}]
  %s2 = inlined_call_operand.hbm [shape: f32[8,128], index: 2, kind: output, shape index: {}]
  %s3 = sld [smem:[#allocation0]]
  $region22: #{tpu_custom_call.1} parent=0
    _
  %s5 = ssub.s32 1, %s3
  %s6 = scalar_select 0, %s5, %s3
  $region1: #{tpu_custom_call.1} parent=0
    #allocation2 [shape = 'u8[131072]{0}', space=vmem, size = 0x20000, scoped, tag = 'input window, operand 1, single buffered']
    #allocation3 [shape = 's32[1]{0}', space=sflag, size = 0x4, scoped, tag = 'scoped memory for tpu_custom_call.1']
    #allocation4 [shape = 's32[1]{0}', space=sflag, size = 0x4, scoped, tag = 'scoped memory for tpu_custom_call.1']
    #allocation5 [shape = 'u8[4096]{0}', space=vmem, size = 0x1000, scoped, tag = 'output window, operand 0, single buffered']
    %7 = vsyncpa [#allocation3], 0
    %8 = vsyncpa [#allocation4], 0
    // Predicated region
    $region2: #{tpu_custom_call.1} parent=1 // pred_check
      _
    $region3: #{tpu_custom_call.1} parent=1 // pred_check_branch
      %10 = sbr.rel (0) target = $region5
    $region4: #{tpu_custom_call.1} parent=1 // pred_region
      _
    $region5: #{tpu_custom_call.1} parent=1 // pred_fallthru
      _
    // Predicated region
    $region6: #{tpu_custom_call.1} parent=1 // pred_check
      _
    $region7: #{tpu_custom_call.1} parent=1 // pred_check_branch
      %12 = sbr.rel (0) target = $region9
    $region8: #{tpu_custom_call.1} parent=1 // pred_region
      %14 = vsyncadd [#allocation3], 0
      %s15 = sshll.u32 %s1, 4
      %s16 = int_to_ptr.hbm [resolvable:$true] %s15
      %s17 = sshll.u32 [#allocation2], 4
      %s18 = int_to_ptr.vmem [resolvable:$true] %s17
      %23 = dma.hbm_to_vmem [thread:$0]  %s16, 4096, %s18, [#allocation3], 256, 256, 16
    $region9: #{tpu_custom_call.1} parent=1 // pred_fallthru
      _
    // Predicated region
    $region10: #{tpu_custom_call.1} parent=1 // pred_check
      _
    $region11: #{tpu_custom_call.1} parent=1 // pred_check_branch
      %25 = sbr.rel (0) target = $region13
    $region12: #{tpu_custom_call.1} parent=1 // pred_region
      %27 = dma.done [#allocation3], 4096
    $region13: #{tpu_custom_call.1} parent=1 // pred_fallthru
      _
    %v28 = vld [vmem:[#allocation2] sm:$0xff]
    %v29 = vld [vmem:[#allocation2 + $0x10] sm:$0xff]
    %v30 = vld [vmem:[#allocation2 + $0xe0] ss:$0 sm:$0xff]
    %v31 = vld [vmem:[%s0] sm:$0xff]
    %v32 = vld [vmem:[%s0 + $0x8] sm:$0xff]
    %v33 = vld [vmem:[%s0 + $0x10] sm:$0xff]
    %v34 = vld [vmem:[%s0 + $0x18] sm:$0xff]
    %v35 = vld [vmem:[%s0 + $0x20] sm:$0xff]
    %v36 = vld [vmem:[%s0 + $0x28] sm:$0xff]
    %v37 = vld [vmem:[%s0 + $0x30] sm:$0xff]
    %v38 = vld [vmem:[%s0 + $0x38] sm:$0xff]
    %vm39 = vcmask 130048
    %v41 = vsel %vm39, %v31, 0
    %v44 = vsel %vm39, %v32, 0
    %v47 = vsel %vm39, %v33, 0
    %v50 = vsel %vm39, %v34, 0
    %v53 = vsel %vm39, %v35, 0
    %v56 = vsel %vm39, %v36, 0
    %v59 = vsel %vm39, %v37, 0
    %v62 = vsel %vm39, %v38, 0
    %64 = vmatpush.msra.mxu0 0.0
    %65 = vmatpush.msra.mxu0 0.0
    %66 = vmatpush.msra.mxu0 0.0
    %67 = vmatpush.msra.mxu0 0.0
    %68 = vmatpush.msra.mxu0 0.0
    %69 = vmatpush.msra.mxu0 0.0
    %70 = vmatpush.msra.mxu0 0.0
    %71 = vmatpush.msra.mxu0 0.0
    %72 = vmatpush.msra.mxu0 0.0
    %73 = vmatpush.msra.mxu0 0.0
    %74 = vmatpush.msra.mxu0 0.0
    %75 = vmatpush.msra.mxu0 0.0
    %76 = vmatpush.msra.mxu0 0.0
    %77 = vmatpush.msra.mxu0 0.0
    %78 = vmatpush.msra.mxu0 %v29
    %79 = vmatpush.msra.mxu0 %v28
    %80 = vmatmul.f32.gmra.mxu0 %v41
    %v81 = vpop.f32.mrf.mxu0
    %v82 = vadd.f32 %v30, %v81
    %83 = vmatmul.f32.gmra.mxu0 %v44
    %v84 = vpop.f32.mrf.mxu0
    %v85 = vadd.f32 %v30, %v84
    %86 = vmatmul.f32.gmra.mxu0 %v47
    %v87 = vpop.f32.mrf.mxu0
    %v88 = vadd.f32 %v30, %v87
    %89 = vmatmul.f32.gmra.mxu0 %v50
    %v90 = vpop.f32.mrf.mxu0
    %v91 = vadd.f32 %v30, %v90
    %92 = vmatmul.f32.gmra.mxu0 %v53
    %v93 = vpop.f32.mrf.mxu0
    %v94 = vadd.f32 %v30, %v93
    %95 = vmatmul.f32.gmra.mxu0 %v56
    %v96 = vpop.f32.mrf.mxu0
    %v97 = vadd.f32 %v30, %v96
    %98 = vmatmul.f32.gmra.mxu0 %v59
    %v99 = vpop.f32.mrf.mxu0
    %v100 = vadd.f32 %v30, %v99
    %101 = vmatmul.f32.gmra.mxu0 %v62
    %v102 = vpop.f32.mrf.mxu0
    %v103 = vadd.f32 %v30, %v102
    %104 = vdwg.mxu0
    %v105 = vld [vmem:[#allocation2 + $0x20] sm:$0xff]
    %v106 = vld [vmem:[#allocation2 + $0x28] sm:$0xff]
    %v107 = vld [vmem:[#allocation2 + $0x30] sm:$0xff]
    %v108 = vld [vmem:[#allocation2 + $0x38] sm:$0xff]
    %v109 = vld [vmem:[#allocation2 + $0x40] sm:$0xff]
    %v110 = vld [vmem:[#allocation2 + $0x48] sm:$0xff]
    %v111 = vld [vmem:[#allocation2 + $0x50] sm:$0xff]
    %v112 = vld [vmem:[#allocation2 + $0x58] sm:$0xff]
    %v113 = vld [vmem:[#allocation2 + $0x60] sm:$0xff]
    %v114 = vld [vmem:[#allocation2 + $0x70] sm:$0xff]
    %v115 = vld [vmem:[#allocation2 + $0x80] sm:$0xff]
    %v116 = vld [vmem:[#allocation2 + $0x90] sm:$0xff]
    %v117 = vld [vmem:[#allocation2 + $0xe8] ss:$0 sm:$0xff]
    %v118 = vadd.f32 %v82, 0.0
    %v119 = vxor.u32 %v118, 2147483648
    %v120 = vmul.f32 %v119, 1.442695
    %v121 = vpow.pop %v120
    %v122 = vadd.f32 %v121, 1.0
    %v123 = vrcp.pop %v122
    %v124 = vmul.f32 %v122, %v123
    %v125 = vsub.f32 1.0, %v124
    %v126 = vmul.f32 %v123, %v125
    %v127 = vadd.f32 %v123, %v126
    %vm128 = vweird.f32 %v122
    %vm129 = vweird.f32 %v123
    %vm130 = vmor %vm128, %vm129
    %v131 = vsel %vm130, %v123, %v127
    %v132 = vand.u32 2147483647, %v122
    %vm133 = vcmp.eq.f32.partialorder %v132, 8.507059e+37
    %v134 = vand.u32 %v122, 2147483648
    %v135 = vor.u32 1.1754944e-38, %v134
    %v136 = vsel %vm133, %v135, %v131
    %v137 = vmul.f32 1.0, %v136
    %v138 = vtanh.pop %v118
    %v139 = vmul.f32 %v137, 0.0
    %141 = vrot.lane.b32.xlu0 %v138, 64
    %v142 = vpop.permute.xlu0 %141
    %v144 = vmul.f32 %v137, %v142
    %146 = vrot.lane.b32.xlu0 %v144, 32
    %v147 = vpop.permute.xlu0 %146
    %v149 = vadd.f32 %v139, %v147
    %v150 = vtanh.pop %v149
    %152 = vrot.lane.b32.xlu0 %v150, 64
    %v153 = vpop.permute.xlu0 %152
    %v155 = vmul.f32 %v137, %v153
    %157 = vrot.lane.b32.xlu0 %v155, 32
    %v158 = vpop.permute.xlu0 %157
    %vm159 = vcmask 261120
    %v160 = vsel %vm159, %v158, 0
    %162 = vmatpush.msra.mxu0 0.0
    %163 = vmatpush.msra.mxu0 0.0
    %164 = vmatpush.msra.mxu0 0.0
    %165 = vmatpush.msra.mxu0 0.0
    %166 = vmatpush.msra.mxu0 0.0
    %167 = vmatpush.msra.mxu0 0.0
    %168 = vmatpush.msra.mxu0 0.0
    %169 = vmatpush.msra.mxu0 0.0
    %170 = vmatpush.msra.mxu0 0.0
    %171 = vmatpush.msra.mxu0 0.0
    %172 = vmatpush.msra.mxu0 0.0
    %173 = vmatpush.msra.mxu0 0.0
    %174 = vmatpush.msra.mxu0 %v111
    %175 = vmatpush.msra.mxu0 %v109
    %176 = vmatpush.msra.mxu0 %v107
    %177 = vmatpush.msra.mxu0 %v105
    %178 = vmatmul.f32.gmra.mxu0 %v160
    %v179 = vpop.f32.mrf.mxu0
    %v180 = vadd.f32 0.0, %v179
    %181 = vdwg.mxu0
    %182 = vmatpush.msra.mxu0 0.0
    %183 = vmatpush.msra.mxu0 0.0
    %184 = vmatpush.msra.mxu0 0.0
    %185 = vmatpush.msra.mxu0 0.0
    %186 = vmatpush.msra.mxu0 0.0
    %187 = vmatpush.msra.mxu0 0.0
    %188 = vmatpush.msra.mxu0 0.0
    %189 = vmatpush.msra.mxu0 0.0
    %190 = vmatpush.msra.mxu0 0.0
    %191 = vmatpush.msra.mxu0 0.0
    %192 = vmatpush.msra.mxu0 0.0
    %193 = vmatpush.msra.mxu0 0.0
    %194 = vmatpush.msra.mxu0 %v112
    %195 = vmatpush.msra.mxu0 %v110
    %196 = vmatpush.msra.mxu0 %v108
    %197 = vmatpush.msra.mxu0 %v106
    %198 = vmatmul.f32.gmra.mxu0 %v160
    %v199 = vpop.f32.mrf.mxu0
    %v200 = vadd.f32 0.0, %v199
    %201 = vdwg.mxu0
    %v202 = vadd.f32 %v200, %v117
    %v204 = vsel %vm159, 0.0, 0
    %206 = vmatpush.msra.mxu0 0.0
    %207 = vmatpush.msra.mxu0 0.0
    %208 = vmatpush.msra.mxu0 0.0
    %209 = vmatpush.msra.mxu0 0.0
    %210 = vmatpush.msra.mxu0 0.0
    %211 = vmatpush.msra.mxu0 0.0
    %212 = vmatpush.msra.mxu0 0.0
    %213 = vmatpush.msra.mxu0 0.0
    %214 = vmatpush.msra.mxu0 0.0
    %215 = vmatpush.msra.mxu0 0.0
    %216 = vmatpush.msra.mxu0 0.0
    %217 = vmatpush.msra.mxu0 0.0
    %218 = vmatpush.msra.mxu0 %v116
    %219 = vmatpush.msra.mxu0 %v115
    %220 = vmatpush.msra.mxu0 %v114
    %221 = vmatpush.msra.mxu0 %v113
    %222 = vmatmul.f32.gmra.mxu0 %v204
    %v223 = vpop.f32.mrf.mxu0
    %v224 = vadd.f32 0.0, %v223
    %225 = vdwg.mxu0
    %v226 = vadd.f32 %v202, %v224
    %v227 = vxor.u32 %v226, 2147483648
    %v228 = vmul.f32 %v227, 1.442695
    %v229 = vpow.pop %v228
    %v230 = vadd.f32 %v229, 1.0
    %v231 = vrcp.pop %v230
    %v232 = vmul.f32 %v230, %v231
    %v233 = vsub.f32 1.0, %v232
    %v234 = vmul.f32 %v231, %v233
    %v235 = vadd.f32 %v231, %v234
    %vm236 = vweird.f32 %v230
    %vm237 = vweird.f32 %v231
    %vm238 = vmor %vm236, %vm237
    %v239 = vsel %vm238, %v231, %v235
    %v240 = vand.u32 2147483647, %v230
    %vm241 = vcmp.eq.f32.partialorder %v240, 8.507059e+37
    %v242 = vand.u32 %v230, 2147483648
    %v243 = vor.u32 1.1754944e-38, %v242
    %v244 = vsel %vm241, %v243, %v239
    %v245 = vmul.f32 1.0, %v244
    %v246 = vtanh.pop %v226
    %v247 = vmul.f32 %v245, 0.0
    %249 = vrot.lane.b32.xlu0 %v246, 64
    %v250 = vpop.permute.xlu0 %249
    %v252 = vmul.f32 %v245, %v250
    %254 = vrot.lane.b32.xlu0 %v252, 32
    %v255 = vpop.permute.xlu0 %254
    %v257 = vadd.f32 %v247, %v255
    %v258 = vtanh.pop %v257
    %260 = vrot.lane.b32.xlu0 %v258, 64
    %v261 = vpop.permute.xlu0 %260
    %v263 = vmul.f32 %v245, %v261
    %v264 = vadd.f32 %v85, %v180
    %v265 = vxor.u32 %v264, 2147483648
    %v266 = vmul.f32 %v265, 1.442695
    %v267 = vpow.pop %v266
    %v268 = vadd.f32 %v267, 1.0
    %v269 = vrcp.pop %v268
    %v270 = vmul.f32 %v268, %v269
    %v271 = vsub.f32 1.0, %v270
    %v272 = vmul.f32 %v269, %v271
    %v273 = vadd.f32 %v269, %v272
    %vm274 = vweird.f32 %v268
    %vm275 = vweird.f32 %v269
    %vm276 = vmor %vm274, %vm275
    %v277 = vsel %vm276, %v269, %v273
    %v278 = vand.u32 2147483647, %v268
    %vm279 = vcmp.eq.f32.partialorder %v278, 8.507059e+37
    %v280 = vand.u32 %v268, 2147483648
    %v281 = vor.u32 1.1754944e-38, %v280
    %v282 = vsel %vm279, %v281, %v277
    %v283 = vmul.f32 1.0, %v282
    %v284 = vtanh.pop %v264
    %v285 = vmul.f32 %v283, %v149
    %287 = vrot.lane.b32.xlu0 %v284, 64
    %v288 = vpop.permute.xlu0 %287
    %v290 = vmul.f32 %v283, %v288
    %292 = vrot.lane.b32.xlu0 %v290, 32
    %v293 = vpop.permute.xlu0 %292
    %v295 = vadd.f32 %v285, %v293
    %v296 = vtanh.pop %v295
    %298 = vrot.lane.b32.xlu0 %v296, 64
    %v299 = vpop.permute.xlu0 %298
    %v301 = vmul.f32 %v283, %v299
    %303 = vrot.lane.b32.xlu0 %v301, 32
    %v304 = vpop.permute.xlu0 %303
    %v305 = vsel %vm159, %v304, 0
    %307 = vmatpush.msra.mxu0 0.0
    %308 = vmatpush.msra.mxu0 0.0
    %309 = vmatpush.msra.mxu0 0.0
    %310 = vmatpush.msra.mxu0 0.0
    %311 = vmatpush.msra.mxu0 0.0
    %312 = vmatpush.msra.mxu0 0.0
    %313 = vmatpush.msra.mxu0 0.0
    %314 = vmatpush.msra.mxu0 0.0
    %315 = vmatpush.msra.mxu0 0.0
    %316 = vmatpush.msra.mxu0 0.0
    %317 = vmatpush.msra.mxu0 0.0
    %318 = vmatpush.msra.mxu0 0.0
    %319 = vmatpush.msra.mxu0 %v111
    %320 = vmatpush.msra.mxu0 %v109
    %321 = vmatpush.msra.mxu0 %v107
    %322 = vmatpush.msra.mxu0 %v105
    %323 = vmatmul.f32.gmra.mxu0 %v305
    %v324 = vpop.f32.mrf.mxu0
    %v325 = vadd.f32 0.0, %v324
    %326 = vdwg.mxu0
    %327 = vmatpush.msra.mxu0 0.0
    %328 = vmatpush.msra.mxu0 0.0
    %329 = vmatpush.msra.mxu0 0.0
    %330 = vmatpush.msra.mxu0 0.0
    %331 = vmatpush.msra.mxu0 0.0
    %332 = vmatpush.msra.mxu0 0.0
    %333 = vmatpush.msra.mxu0 0.0
    %334 = vmatpush.msra.mxu0 0.0
    %335 = vmatpush.msra.mxu0 0.0
    %336 = vmatpush.msra.mxu0 0.0
    %337 = vmatpush.msra.mxu0 0.0
    %338 = vmatpush.msra.mxu0 0.0
    %339 = vmatpush.msra.mxu0 %v112
    %340 = vmatpush.msra.mxu0 %v110
    %341 = vmatpush.msra.mxu0 %v108
    %342 = vmatpush.msra.mxu0 %v106
    %343 = vmatmul.f32.gmra.mxu0 %v305
    %v344 = vpop.f32.mrf.mxu0
    %v345 = vadd.f32 0.0, %v344
    %346 = vdwg.mxu0
    %v347 = vadd.f32 %v345, %v117
    %349 = vrot.lane.b32.xlu0 %v263, 32
    %v350 = vpop.permute.xlu0 %349
    %v351 = vsel %vm159, %v350, 0
    %353 = vmatpush.msra.mxu0 0.0
    %354 = vmatpush.msra.mxu0 0.0
    %355 = vmatpush.msra.mxu0 0.0
    %356 = vmatpush.msra.mxu0 0.0
    %357 = vmatpush.msra.mxu0 0.0
    %358 = vmatpush.msra.mxu0 0.0
    %359 = vmatpush.msra.mxu0 0.0
    %360 = vmatpush.msra.mxu0 0.0
    %361 = vmatpush.msra.mxu0 0.0
    %362 = vmatpush.msra.mxu0 0.0
    %363 = vmatpush.msra.mxu0 0.0
    %364 = vmatpush.msra.mxu0 0.0
    %365 = vmatpush.msra.mxu0 %v116
    %366 = vmatpush.msra.mxu0 %v115
    %367 = vmatpush.msra.mxu0 %v114
    %368 = vmatpush.msra.mxu0 %v113
    %369 = vmatmul.f32.gmra.mxu0 %v351
    %v370 = vpop.f32.mrf.mxu0
    %v371 = vadd.f32 0.0, %v370
    %372 = vdwg.mxu0
    %v373 = vadd.f32 %v347, %v371
    %v374 = vxor.u32 %v373, 2147483648
    %v375 = vmul.f32 %v374, 1.442695
    %v376 = vpow.pop %v375
    %v377 = vadd.f32 %v376, 1.0
    %v378 = vrcp.pop %v377
    %v379 = vmul.f32 %v377, %v378
    %v380 = vsub.f32 1.0, %v379
    %v381 = vmul.f32 %v378, %v380
    %v382 = vadd.f32 %v378, %v381
    %vm383 = vweird.f32 %v377
    %vm384 = vweird.f32 %v378
    %vm385 = vmor %vm383, %vm384
    %v386 = vsel %vm385, %v378, %v382
    %v387 = vand.u32 2147483647, %v377
    %vm388 = vcmp.eq.f32.partialorder %v387, 8.507059e+37
    %v389 = vand.u32 %v377, 2147483648
    %v390 = vor.u32 1.1754944e-38, %v389
    %v391 = vsel %vm388, %v390, %v386
    %v392 = vmul.f32 1.0, %v391
    %v393 = vtanh.pop %v373
    %v394 = vmul.f32 %v392, %v257
    %396 = vrot.lane.b32.xlu0 %v393, 64
    %v397 = vpop.permute.xlu0 %396
    %v399 = vmul.f32 %v392, %v397
    %401 = vrot.lane.b32.xlu0 %v399, 32
    %v402 = vpop.permute.xlu0 %401
    %v404 = vadd.f32 %v394, %v402
    %v405 = vtanh.pop %v404
    %407 = vrot.lane.b32.xlu0 %v405, 64
    %v408 = vpop.permute.xlu0 %407
    %v410 = vmul.f32 %v392, %v408
    %v411 = vadd.f32 %v88, %v325
    %v412 = vxor.u32 %v411, 2147483648
    %v413 = vmul.f32 %v412, 1.442695
    %v414 = vpow.pop %v413
    %v415 = vadd.f32 %v414, 1.0
    %v416 = vrcp.pop %v415
    %v417 = vmul.f32 %v415, %v416
    %v418 = vsub.f32 1.0, %v417
    %v419 = vmul.f32 %v416, %v418
    %v420 = vadd.f32 %v416, %v419
    %vm421 = vweird.f32 %v415
    %vm422 = vweird.f32 %v416
    %vm423 = vmor %vm421, %vm422
    %v424 = vsel %vm423, %v416, %v420
    %v425 = vand.u32 2147483647, %v415
    %vm426 = vcmp.eq.f32.partialorder %v425, 8.507059e+37
    %v427 = vand.u32 %v415, 2147483648
    %v428 = vor.u32 1.1754944e-38, %v427
    %v429 = vsel %vm426, %v428, %v424
    %v430 = vmul.f32 1.0, %v429
    %v431 = vtanh.pop %v411
    %v432 = vmul.f32 %v430, %v295
    %434 = vrot.lane.b32.xlu0 %v431, 64
    %v435 = vpop.permute.xlu0 %434
    %v437 = vmul.f32 %v430, %v435
    %439 = vrot.lane.b32.xlu0 %v437, 32
    %v440 = vpop.permute.xlu0 %439
    %v442 = vadd.f32 %v432, %v440
    %v443 = vtanh.pop %v442
    %445 = vrot.lane.b32.xlu0 %v443, 64
    %v446 = vpop.permute.xlu0 %445
    %v448 = vmul.f32 %v430, %v446
    %450 = vrot.lane.b32.xlu0 %v448, 32
    %v451 = vpop.permute.xlu0 %450
    %v452 = vsel %vm159, %v451, 0
    %454 = vmatpush.msra.mxu0 0.0
    %455 = vmatpush.msra.mxu0 0.0
    %456 = vmatpush.msra.mxu0 0.0
    %457 = vmatpush.msra.mxu0 0.0
    %458 = vmatpush.msra.mxu0 0.0
    %459 = vmatpush.msra.mxu0 0.0
    %460 = vmatpush.msra.mxu0 0.0
    %461 = vmatpush.msra.mxu0 0.0
    %462 = vmatpush.msra.mxu0 0.0
    %463 = vmatpush.msra.mxu0 0.0
    %464 = vmatpush.msra.mxu0 0.0
    %465 = vmatpush.msra.mxu0 0.0
    %466 = vmatpush.msra.mxu0 %v111
    %467 = vmatpush.msra.mxu0 %v109
    %468 = vmatpush.msra.mxu0 %v107
    %469 = vmatpush.msra.mxu0 %v105
    %470 = vmatmul.f32.gmra.mxu0 %v452
    %v471 = vpop.f32.mrf.mxu0
    %v472 = vadd.f32 0.0, %v471
    %473 = vdwg.mxu0
    %474 = vmatpush.msra.mxu0 0.0
    %475 = vmatpush.msra.mxu0 0.0
    %476 = vmatpush.msra.mxu0 0.0
    %477 = vmatpush.msra.mxu0 0.0
    %478 = vmatpush.msra.mxu0 0.0
    %479 = vmatpush.msra.mxu0 0.0
    %480 = vmatpush.msra.mxu0 0.0
    %481 = vmatpush.msra.mxu0 0.0
    %482 = vmatpush.msra.mxu0 0.0
    %483 = vmatpush.msra.mxu0 0.0
    %484 = vmatpush.msra.mxu0 0.0
    %485 = vmatpush.msra.mxu0 0.0
    %486 = vmatpush.msra.mxu0 %v112
    %487 = vmatpush.msra.mxu0 %v110
    %488 = vmatpush.msra.mxu0 %v108
    %489 = vmatpush.msra.mxu0 %v106
    %490 = vmatmul.f32.gmra.mxu0 %v452
    %v491 = vpop.f32.mrf.mxu0
    %v492 = vadd.f32 0.0, %v491
    %493 = vdwg.mxu0
    %v494 = vadd.f32 %v492, %v117
    %496 = vrot.lane.b32.xlu0 %v410, 32
    %v497 = vpop.permute.xlu0 %496
    %v498 = vsel %vm159, %v497, 0
    %500 = vmatpush.msra.mxu0 0.0
    %501 = vmatpush.msra.mxu0 0.0
    %502 = vmatpush.msra.mxu0 0.0
    %503 = vmatpush.msra.mxu0 0.0
    %504 = vmatpush.msra.mxu0 0.0
    %505 = vmatpush.msra.mxu0 0.0
    %506 = vmatpush.msra.mxu0 0.0
    %507 = vmatpush.msra.mxu0 0.0
    %508 = vmatpush.msra.mxu0 0.0
    %509 = vmatpush.msra.mxu0 0.0
    %510 = vmatpush.msra.mxu0 0.0
    %511 = vmatpush.msra.mxu0 0.0
    %512 = vmatpush.msra.mxu0 %v116
    %513 = vmatpush.msra.mxu0 %v115
    %514 = vmatpush.msra.mxu0 %v114
    %515 = vmatpush.msra.mxu0 %v113
    %516 = vmatmul.f32.gmra.mxu0 %v498
    %v517 = vpop.f32.mrf.mxu0
    %v518 = vadd.f32 0.0, %v517
    %519 = vdwg.mxu0
    %v520 = vadd.f32 %v494, %v518
    %v521 = vxor.u32 %v520, 2147483648
    %v522 = vmul.f32 %v521, 1.442695
    %v523 = vpow.pop %v522
    %v524 = vadd.f32 %v523, 1.0
    %v525 = vrcp.pop %v524
    %v526 = vmul.f32 %v524, %v525
    %v527 = vsub.f32 1.0, %v526
    %v528 = vmul.f32 %v525, %v527
    %v529 = vadd.f32 %v525, %v528
    %vm530 = vweird.f32 %v524
    %vm531 = vweird.f32 %v525
    %vm532 = vmor %vm530, %vm531
    %v533 = vsel %vm532, %v525, %v529
    %v534 = vand.u32 2147483647, %v524
    %vm535 = vcmp.eq.f32.partialorder %v534, 8.507059e+37
    %v536 = vand.u32 %v524, 2147483648
    %v537 = vor.u32 1.1754944e-38, %v536
    %v538 = vsel %vm535, %v537, %v533
    %v539 = vmul.f32 1.0, %v538
    %v540 = vtanh.pop %v520
    %v541 = vmul.f32 %v539, %v404
    %543 = vrot.lane.b32.xlu0 %v540, 64
    %v544 = vpop.permute.xlu0 %543
    %v546 = vmul.f32 %v539, %v544
    %548 = vrot.lane.b32.xlu0 %v546, 32
    %v549 = vpop.permute.xlu0 %548
    %v551 = vadd.f32 %v541, %v549
    %v552 = vtanh.pop %v551
    %554 = vrot.lane.b32.xlu0 %v552, 64
    %v555 = vpop.permute.xlu0 %554
    %v557 = vmul.f32 %v539, %v555
    %v558 = vadd.f32 %v91, %v472
    %v559 = vxor.u32 %v558, 2147483648
    %v560 = vmul.f32 %v559, 1.442695
    %v561 = vpow.pop %v560
    %v562 = vadd.f32 %v561, 1.0
    %v563 = vrcp.pop %v562
    %v564 = vmul.f32 %v562, %v563
    %v565 = vsub.f32 1.0, %v564
    %v566 = vmul.f32 %v563, %v565
    %v567 = vadd.f32 %v563, %v566
    %vm568 = vweird.f32 %v562
    %vm569 = vweird.f32 %v563
    %vm570 = vmor %vm568, %vm569
    %v571 = vsel %vm570, %v563, %v567
    %v572 = vand.u32 2147483647, %v562
    %vm573 = vcmp.eq.f32.partialorder %v572, 8.507059e+37
    %v574 = vand.u32 %v562, 2147483648
    %v575 = vor.u32 1.1754944e-38, %v574
    %v576 = vsel %vm573, %v575, %v571
    %v577 = vmul.f32 1.0, %v576
    %v578 = vtanh.pop %v558
    %v579 = vmul.f32 %v577, %v442
    %581 = vrot.lane.b32.xlu0 %v578, 64
    %v582 = vpop.permute.xlu0 %581
    %v584 = vmul.f32 %v577, %v582
    %586 = vrot.lane.b32.xlu0 %v584, 32
    %v587 = vpop.permute.xlu0 %586
    %v589 = vadd.f32 %v579, %v587
    %v590 = vtanh.pop %v589
    %592 = vrot.lane.b32.xlu0 %v590, 64
    %v593 = vpop.permute.xlu0 %592
    %v595 = vmul.f32 %v577, %v593
    %597 = vrot.lane.b32.xlu0 %v595, 32
    %v598 = vpop.permute.xlu0 %597
    %v599 = vsel %vm159, %v598, 0
    %601 = vmatpush.msra.mxu0 0.0
    %602 = vmatpush.msra.mxu0 0.0
    %603 = vmatpush.msra.mxu0 0.0
    %604 = vmatpush.msra.mxu0 0.0
    %605 = vmatpush.msra.mxu0 0.0
    %606 = vmatpush.msra.mxu0 0.0
    %607 = vmatpush.msra.mxu0 0.0
    %608 = vmatpush.msra.mxu0 0.0
    %609 = vmatpush.msra.mxu0 0.0
    %610 = vmatpush.msra.mxu0 0.0
    %611 = vmatpush.msra.mxu0 0.0
    %612 = vmatpush.msra.mxu0 0.0
    %613 = vmatpush.msra.mxu0 %v111
    %614 = vmatpush.msra.mxu0 %v109
    %615 = vmatpush.msra.mxu0 %v107
    %616 = vmatpush.msra.mxu0 %v105
    %617 = vmatmul.f32.gmra.mxu0 %v599
    %v618 = vpop.f32.mrf.mxu0
    %v619 = vadd.f32 0.0, %v618
    %620 = vdwg.mxu0
    %621 = vmatpush.msra.mxu0 0.0
    %622 = vmatpush.msra.mxu0 0.0
    %623 = vmatpush.msra.mxu0 0.0
    %624 = vmatpush.msra.mxu0 0.0
    %625 = vmatpush.msra.mxu0 0.0
    %626 = vmatpush.msra.mxu0 0.0
    %627 = vmatpush.msra.mxu0 0.0
    %628 = vmatpush.msra.mxu0 0.0
    %629 = vmatpush.msra.mxu0 0.0
    %630 = vmatpush.msra.mxu0 0.0
    %631 = vmatpush.msra.mxu0 0.0
    %632 = vmatpush.msra.mxu0 0.0
    %633 = vmatpush.msra.mxu0 %v112
    %634 = vmatpush.msra.mxu0 %v110
    %635 = vmatpush.msra.mxu0 %v108
    %636 = vmatpush.msra.mxu0 %v106
    %637 = vmatmul.f32.gmra.mxu0 %v599
    %v638 = vpop.f32.mrf.mxu0
    %v639 = vadd.f32 0.0, %v638
    %640 = vdwg.mxu0
    %v641 = vadd.f32 %v639, %v117
    %643 = vrot.lane.b32.xlu0 %v557, 32
    %v644 = vpop.permute.xlu0 %643
    %v645 = vsel %vm159, %v644, 0
    %647 = vmatpush.msra.mxu0 0.0
    %648 = vmatpush.msra.mxu0 0.0
    %649 = vmatpush.msra.mxu0 0.0
    %650 = vmatpush.msra.mxu0 0.0
    %651 = vmatpush.msra.mxu0 0.0
    %652 = vmatpush.msra.mxu0 0.0
    %653 = vmatpush.msra.mxu0 0.0
    %654 = vmatpush.msra.mxu0 0.0
    %655 = vmatpush.msra.mxu0 0.0
    %656 = vmatpush.msra.mxu0 0.0
    %657 = vmatpush.msra.mxu0 0.0
    %658 = vmatpush.msra.mxu0 0.0
    %659 = vmatpush.msra.mxu0 %v116
    %660 = vmatpush.msra.mxu0 %v115
    %661 = vmatpush.msra.mxu0 %v114
    %662 = vmatpush.msra.mxu0 %v113
    %663 = vmatmul.f32.gmra.mxu0 %v645
    %v664 = vpop.f32.mrf.mxu0
    %v665 = vadd.f32 0.0, %v664
    %666 = vdwg.mxu0
    %v667 = vadd.f32 %v641, %v665
    %v668 = vxor.u32 %v667, 2147483648
    %v669 = vmul.f32 %v668, 1.442695
    %v670 = vpow.pop %v669
    %v671 = vadd.f32 %v670, 1.0
    %v672 = vrcp.pop %v671
    %v673 = vmul.f32 %v671, %v672
    %v674 = vsub.f32 1.0, %v673
    %v675 = vmul.f32 %v672, %v674
    %v676 = vadd.f32 %v672, %v675
    %vm677 = vweird.f32 %v671
    %vm678 = vweird.f32 %v672
    %vm679 = vmor %vm677, %vm678
    %v680 = vsel %vm679, %v672, %v676
    %v681 = vand.u32 2147483647, %v671
    %vm682 = vcmp.eq.f32.partialorder %v681, 8.507059e+37
    %v683 = vand.u32 %v671, 2147483648
    %v684 = vor.u32 1.1754944e-38, %v683
    %v685 = vsel %vm682, %v684, %v680
    %v686 = vmul.f32 1.0, %v685
    %v687 = vtanh.pop %v667
    %v688 = vmul.f32 %v686, %v551
    %690 = vrot.lane.b32.xlu0 %v687, 64
    %v691 = vpop.permute.xlu0 %690
    %v693 = vmul.f32 %v686, %v691
    %695 = vrot.lane.b32.xlu0 %v693, 32
    %v696 = vpop.permute.xlu0 %695
    %v698 = vadd.f32 %v688, %v696
    %v699 = vtanh.pop %v698
    %701 = vrot.lane.b32.xlu0 %v699, 64
    %v702 = vpop.permute.xlu0 %701
    %v704 = vmul.f32 %v686, %v702
    %v705 = vadd.f32 %v94, %v619
    %v706 = vxor.u32 %v705, 2147483648
    %v707 = vmul.f32 %v706, 1.442695
    %v708 = vpow.pop %v707
    %v709 = vadd.f32 %v708, 1.0
    %v710 = vrcp.pop %v709
    %v711 = vmul.f32 %v709, %v710
    %v712 = vsub.f32 1.0, %v711
    %v713 = vmul.f32 %v710, %v712
    %v714 = vadd.f32 %v710, %v713
    %vm715 = vweird.f32 %v709
    %vm716 = vweird.f32 %v710
    %vm717 = vmor %vm715, %vm716
    %v718 = vsel %vm717, %v710, %v714
    %v719 = vand.u32 2147483647, %v709
    %vm720 = vcmp.eq.f32.partialorder %v719, 8.507059e+37
    %v721 = vand.u32 %v709, 2147483648
    %v722 = vor.u32 1.1754944e-38, %v721
    %v723 = vsel %vm720, %v722, %v718
    %v724 = vmul.f32 1.0, %v723
    %v725 = vtanh.pop %v705
    %v726 = vmul.f32 %v724, %v589
    %728 = vrot.lane.b32.xlu0 %v725, 64
    %v729 = vpop.permute.xlu0 %728
    %v731 = vmul.f32 %v724, %v729
    %733 = vrot.lane.b32.xlu0 %v731, 32
    %v734 = vpop.permute.xlu0 %733
    %v736 = vadd.f32 %v726, %v734
    %v737 = vtanh.pop %v736
    %739 = vrot.lane.b32.xlu0 %v737, 64
    %v740 = vpop.permute.xlu0 %739
    %v742 = vmul.f32 %v724, %v740
    %744 = vrot.lane.b32.xlu0 %v742, 32
    %v745 = vpop.permute.xlu0 %744
    %v746 = vsel %vm159, %v745, 0
    %748 = vmatpush.msra.mxu0 0.0
    %749 = vmatpush.msra.mxu0 0.0
    %750 = vmatpush.msra.mxu0 0.0
    %751 = vmatpush.msra.mxu0 0.0
    %752 = vmatpush.msra.mxu0 0.0
    %753 = vmatpush.msra.mxu0 0.0
    %754 = vmatpush.msra.mxu0 0.0
    %755 = vmatpush.msra.mxu0 0.0
    %756 = vmatpush.msra.mxu0 0.0
    %757 = vmatpush.msra.mxu0 0.0
    %758 = vmatpush.msra.mxu0 0.0
    %759 = vmatpush.msra.mxu0 0.0
    %760 = vmatpush.msra.mxu0 %v111
    %761 = vmatpush.msra.mxu0 %v109
    %762 = vmatpush.msra.mxu0 %v107
    %763 = vmatpush.msra.mxu0 %v105
    %764 = vmatmul.f32.gmra.mxu0 %v746
    %v765 = vpop.f32.mrf.mxu0
    %v766 = vadd.f32 0.0, %v765
    %767 = vdwg.mxu0
    %768 = vmatpush.msra.mxu0 0.0
    %769 = vmatpush.msra.mxu0 0.0
    %770 = vmatpush.msra.mxu0 0.0
    %771 = vmatpush.msra.mxu0 0.0
    %772 = vmatpush.msra.mxu0 0.0
    %773 = vmatpush.msra.mxu0 0.0
    %774 = vmatpush.msra.mxu0 0.0
    %775 = vmatpush.msra.mxu0 0.0
    %776 = vmatpush.msra.mxu0 0.0
    %777 = vmatpush.msra.mxu0 0.0
    %778 = vmatpush.msra.mxu0 0.0
    %779 = vmatpush.msra.mxu0 0.0
    %780 = vmatpush.msra.mxu0 %v112
    %781 = vmatpush.msra.mxu0 %v110
    %782 = vmatpush.msra.mxu0 %v108
    %783 = vmatpush.msra.mxu0 %v106
    %784 = vmatmul.f32.gmra.mxu0 %v746
    %v785 = vpop.f32.mrf.mxu0
    %v786 = vadd.f32 0.0, %v785
    %787 = vdwg.mxu0
    %v788 = vadd.f32 %v786, %v117
    %790 = vrot.lane.b32.xlu0 %v704, 32
    %v791 = vpop.permute.xlu0 %790
    %v792 = vsel %vm159, %v791, 0
    %794 = vmatpush.msra.mxu0 0.0
    %795 = vmatpush.msra.mxu0 0.0
    %796 = vmatpush.msra.mxu0 0.0
    %797 = vmatpush.msra.mxu0 0.0
    %798 = vmatpush.msra.mxu0 0.0
    %799 = vmatpush.msra.mxu0 0.0
    %800 = vmatpush.msra.mxu0 0.0
    %801 = vmatpush.msra.mxu0 0.0
    %802 = vmatpush.msra.mxu0 0.0
    %803 = vmatpush.msra.mxu0 0.0
    %804 = vmatpush.msra.mxu0 0.0
    %805 = vmatpush.msra.mxu0 0.0
    %806 = vmatpush.msra.mxu0 %v116
    %807 = vmatpush.msra.mxu0 %v115
    %808 = vmatpush.msra.mxu0 %v114
    %809 = vmatpush.msra.mxu0 %v113
    %810 = vmatmul.f32.gmra.mxu0 %v792
    %v811 = vpop.f32.mrf.mxu0
    %v812 = vadd.f32 0.0, %v811
    %813 = vdwg.mxu0
    %v814 = vadd.f32 %v788, %v812
    %v815 = vxor.u32 %v814, 2147483648
    %v816 = vmul.f32 %v815, 1.442695
    %v817 = vpow.pop %v816
    %v818 = vadd.f32 %v817, 1.0
    %v819 = vrcp.pop %v818
    %v820 = vmul.f32 %v818, %v819
    %v821 = vsub.f32 1.0, %v820
    %v822 = vmul.f32 %v819, %v821
    %v823 = vadd.f32 %v819, %v822
    %vm824 = vweird.f32 %v818
    %vm825 = vweird.f32 %v819
    %vm826 = vmor %vm824, %vm825
    %v827 = vsel %vm826, %v819, %v823
    %v828 = vand.u32 2147483647, %v818
    %vm829 = vcmp.eq.f32.partialorder %v828, 8.507059e+37
    %v830 = vand.u32 %v818, 2147483648
    %v831 = vor.u32 1.1754944e-38, %v830
    %v832 = vsel %vm829, %v831, %v827
    %v833 = vmul.f32 1.0, %v832
    %v834 = vtanh.pop %v814
    %v835 = vmul.f32 %v833, %v698
    %837 = vrot.lane.b32.xlu0 %v834, 64
    %v838 = vpop.permute.xlu0 %837
    %v840 = vmul.f32 %v833, %v838
    %842 = vrot.lane.b32.xlu0 %v840, 32
    %v843 = vpop.permute.xlu0 %842
    %v845 = vadd.f32 %v835, %v843
    %v846 = vtanh.pop %v845
    %848 = vrot.lane.b32.xlu0 %v846, 64
    %v849 = vpop.permute.xlu0 %848
    %v851 = vmul.f32 %v833, %v849
    %v852 = vadd.f32 %v97, %v766
    %v853 = vxor.u32 %v852, 2147483648
    %v854 = vmul.f32 %v853, 1.442695
    %v855 = vpow.pop %v854
    %v856 = vadd.f32 %v855, 1.0
    %v857 = vrcp.pop %v856
    %v858 = vmul.f32 %v856, %v857
    %v859 = vsub.f32 1.0, %v858
    %v860 = vmul.f32 %v857, %v859
    %v861 = vadd.f32 %v857, %v860
    %vm862 = vweird.f32 %v856
    %vm863 = vweird.f32 %v857
    %vm864 = vmor %vm862, %vm863
    %v865 = vsel %vm864, %v857, %v861
    %v866 = vand.u32 2147483647, %v856
    %vm867 = vcmp.eq.f32.partialorder %v866, 8.507059e+37
    %v868 = vand.u32 %v856, 2147483648
    %v869 = vor.u32 1.1754944e-38, %v868
    %v870 = vsel %vm867, %v869, %v865
    %v871 = vmul.f32 1.0, %v870
    %v872 = vtanh.pop %v852
    %v873 = vmul.f32 %v871, %v736
    %875 = vrot.lane.b32.xlu0 %v872, 64
    %v876 = vpop.permute.xlu0 %875
    %v878 = vmul.f32 %v871, %v876
    %880 = vrot.lane.b32.xlu0 %v878, 32
    %v881 = vpop.permute.xlu0 %880
    %v883 = vadd.f32 %v873, %v881
    %v884 = vtanh.pop %v883
    %886 = vrot.lane.b32.xlu0 %v884, 64
    %v887 = vpop.permute.xlu0 %886
    %v889 = vmul.f32 %v871, %v887
    %891 = vrot.lane.b32.xlu0 %v889, 32
    %v892 = vpop.permute.xlu0 %891
    %v893 = vsel %vm159, %v892, 0
    %895 = vmatpush.msra.mxu0 0.0
    %896 = vmatpush.msra.mxu0 0.0
    %897 = vmatpush.msra.mxu0 0.0
    %898 = vmatpush.msra.mxu0 0.0
    %899 = vmatpush.msra.mxu0 0.0
    %900 = vmatpush.msra.mxu0 0.0
    %901 = vmatpush.msra.mxu0 0.0
    %902 = vmatpush.msra.mxu0 0.0
    %903 = vmatpush.msra.mxu0 0.0
    %904 = vmatpush.msra.mxu0 0.0
    %905 = vmatpush.msra.mxu0 0.0
    %906 = vmatpush.msra.mxu0 0.0
    %907 = vmatpush.msra.mxu0 %v111
    %908 = vmatpush.msra.mxu0 %v109
    %909 = vmatpush.msra.mxu0 %v107
    %910 = vmatpush.msra.mxu0 %v105
    %911 = vmatmul.f32.gmra.mxu0 %v893
    %v912 = vpop.f32.mrf.mxu0
    %v913 = vadd.f32 0.0, %v912
    %914 = vdwg.mxu0
    %915 = vmatpush.msra.mxu0 0.0
    %916 = vmatpush.msra.mxu0 0.0
    %917 = vmatpush.msra.mxu0 0.0
    %918 = vmatpush.msra.mxu0 0.0
    %919 = vmatpush.msra.mxu0 0.0
    %920 = vmatpush.msra.mxu0 0.0
    %921 = vmatpush.msra.mxu0 0.0
    %922 = vmatpush.msra.mxu0 0.0
    %923 = vmatpush.msra.mxu0 0.0
    %924 = vmatpush.msra.mxu0 0.0
    %925 = vmatpush.msra.mxu0 0.0
    %926 = vmatpush.msra.mxu0 0.0
    %927 = vmatpush.msra.mxu0 %v112
    %928 = vmatpush.msra.mxu0 %v110
    %929 = vmatpush.msra.mxu0 %v108
    %930 = vmatpush.msra.mxu0 %v106
    %931 = vmatmul.f32.gmra.mxu0 %v893
    %v932 = vpop.f32.mrf.mxu0
    %v933 = vadd.f32 0.0, %v932
    %934 = vdwg.mxu0
    %v935 = vadd.f32 %v933, %v117
    %937 = vrot.lane.b32.xlu0 %v851, 32
    %v938 = vpop.permute.xlu0 %937
    %v939 = vsel %vm159, %v938, 0
    %941 = vmatpush.msra.mxu0 0.0
    %942 = vmatpush.msra.mxu0 0.0
    %943 = vmatpush.msra.mxu0 0.0
    %944 = vmatpush.msra.mxu0 0.0
    %945 = vmatpush.msra.mxu0 0.0
    %946 = vmatpush.msra.mxu0 0.0
    %947 = vmatpush.msra.mxu0 0.0
    %948 = vmatpush.msra.mxu0 0.0
    %949 = vmatpush.msra.mxu0 0.0
    %950 = vmatpush.msra.mxu0 0.0
    %951 = vmatpush.msra.mxu0 0.0
    %952 = vmatpush.msra.mxu0 0.0
    %953 = vmatpush.msra.mxu0 %v116
    %954 = vmatpush.msra.mxu0 %v115
    %955 = vmatpush.msra.mxu0 %v114
    %956 = vmatpush.msra.mxu0 %v113
    %957 = vmatmul.f32.gmra.mxu0 %v939
    %v958 = vpop.f32.mrf.mxu0
    %v959 = vadd.f32 0.0, %v958
    %960 = vdwg.mxu0
    %v961 = vadd.f32 %v935, %v959
    %v962 = vxor.u32 %v961, 2147483648
    %v963 = vmul.f32 %v962, 1.442695
    %v964 = vpow.pop %v963
    %v965 = vadd.f32 %v964, 1.0
    %v966 = vrcp.pop %v965
    %v967 = vmul.f32 %v965, %v966
    %v968 = vsub.f32 1.0, %v967
    %v969 = vmul.f32 %v966, %v968
    %v970 = vadd.f32 %v966, %v969
    %vm971 = vweird.f32 %v965
    %vm972 = vweird.f32 %v966
    %vm973 = vmor %vm971, %vm972
    %v974 = vsel %vm973, %v966, %v970
    %v975 = vand.u32 2147483647, %v965
    %vm976 = vcmp.eq.f32.partialorder %v975, 8.507059e+37
    %v977 = vand.u32 %v965, 2147483648
    %v978 = vor.u32 1.1754944e-38, %v977
    %v979 = vsel %vm976, %v978, %v974
    %v980 = vmul.f32 1.0, %v979
    %v981 = vtanh.pop %v961
    %v982 = vmul.f32 %v980, %v845
    %984 = vrot.lane.b32.xlu0 %v981, 64
    %v985 = vpop.permute.xlu0 %984
    %v987 = vmul.f32 %v980, %v985
    %989 = vrot.lane.b32.xlu0 %v987, 32
    %v990 = vpop.permute.xlu0 %989
    %v992 = vadd.f32 %v982, %v990
    %v993 = vtanh.pop %v992
    %995 = vrot.lane.b32.xlu0 %v993, 64
    %v996 = vpop.permute.xlu0 %995
    %v998 = vmul.f32 %v980, %v996
    %v999 = vadd.f32 %v100, %v913
    %v1000 = vxor.u32 %v999, 2147483648
    %v1001 = vmul.f32 %v1000, 1.442695
    %v1002 = vpow.pop %v1001
    %v1003 = vadd.f32 %v1002, 1.0
    %v1004 = vrcp.pop %v1003
    %v1005 = vmul.f32 %v1003, %v1004
    %v1006 = vsub.f32 1.0, %v1005
    %v1007 = vmul.f32 %v1004, %v1006
    %v1008 = vadd.f32 %v1004, %v1007
    %vm1009 = vweird.f32 %v1003
    %vm1010 = vweird.f32 %v1004
    %vm1011 = vmor %vm1009, %vm1010
    %v1012 = vsel %vm1011, %v1004, %v1008
    %v1013 = vand.u32 2147483647, %v1003
    %vm1014 = vcmp.eq.f32.partialorder %v1013, 8.507059e+37
    %v1015 = vand.u32 %v1003, 2147483648
    %v1016 = vor.u32 1.1754944e-38, %v1015
    %v1017 = vsel %vm1014, %v1016, %v1012
    %v1018 = vmul.f32 1.0, %v1017
    %v1019 = vtanh.pop %v999
    %v1020 = vmul.f32 %v1018, %v883
    %1022 = vrot.lane.b32.xlu0 %v1019, 64
    %v1023 = vpop.permute.xlu0 %1022
    %v1025 = vmul.f32 %v1018, %v1023
    %1027 = vrot.lane.b32.xlu0 %v1025, 32
    %v1028 = vpop.permute.xlu0 %1027
    %v1030 = vadd.f32 %v1020, %v1028
    %v1031 = vtanh.pop %v1030
    %1033 = vrot.lane.b32.xlu0 %v1031, 64
    %v1034 = vpop.permute.xlu0 %1033
    %v1036 = vmul.f32 %v1018, %v1034
    %1038 = vrot.lane.b32.xlu0 %v1036, 32
    %v1039 = vpop.permute.xlu0 %1038
    %v1040 = vsel %vm159, %v1039, 0
    %1042 = vmatpush.msra.mxu0 0.0
    %1043 = vmatpush.msra.mxu0 0.0
    %1044 = vmatpush.msra.mxu0 0.0
    %1045 = vmatpush.msra.mxu0 0.0
    %1046 = vmatpush.msra.mxu0 0.0
    %1047 = vmatpush.msra.mxu0 0.0
    %1048 = vmatpush.msra.mxu0 0.0
    %1049 = vmatpush.msra.mxu0 0.0
    %1050 = vmatpush.msra.mxu0 0.0
    %1051 = vmatpush.msra.mxu0 0.0
    %1052 = vmatpush.msra.mxu0 0.0
    %1053 = vmatpush.msra.mxu0 0.0
    %1054 = vmatpush.msra.mxu0 %v111
    %1055 = vmatpush.msra.mxu0 %v109
    %1056 = vmatpush.msra.mxu0 %v107
    %1057 = vmatpush.msra.mxu0 %v105
    %1058 = vmatmul.f32.gmra.mxu0 %v1040
    %v1059 = vpop.f32.mrf.mxu0
    %v1060 = vadd.f32 0.0, %v1059
    %1061 = vdwg.mxu0
    %1062 = vmatpush.msra.mxu0 0.0
    %1063 = vmatpush.msra.mxu0 0.0
    %1064 = vmatpush.msra.mxu0 0.0
    %1065 = vmatpush.msra.mxu0 0.0
    %1066 = vmatpush.msra.mxu0 0.0
    %1067 = vmatpush.msra.mxu0 0.0
    %1068 = vmatpush.msra.mxu0 0.0
    %1069 = vmatpush.msra.mxu0 0.0
    %1070 = vmatpush.msra.mxu0 0.0
    %1071 = vmatpush.msra.mxu0 0.0
    %1072 = vmatpush.msra.mxu0 0.0
    %1073 = vmatpush.msra.mxu0 0.0
    %1074 = vmatpush.msra.mxu0 %v112
    %1075 = vmatpush.msra.mxu0 %v110
    %1076 = vmatpush.msra.mxu0 %v108
    %1077 = vmatpush.msra.mxu0 %v106
    %1078 = vmatmul.f32.gmra.mxu0 %v1040
    %v1079 = vpop.f32.mrf.mxu0
    %v1080 = vadd.f32 0.0, %v1079
    %1081 = vdwg.mxu0
    %v1082 = vadd.f32 %v1080, %v117
    %1084 = vrot.lane.b32.xlu0 %v998, 32
    %v1085 = vpop.permute.xlu0 %1084
    %v1086 = vsel %vm159, %v1085, 0
    %1088 = vmatpush.msra.mxu0 0.0
    %1089 = vmatpush.msra.mxu0 0.0
    %1090 = vmatpush.msra.mxu0 0.0
    %1091 = vmatpush.msra.mxu0 0.0
    %1092 = vmatpush.msra.mxu0 0.0
    %1093 = vmatpush.msra.mxu0 0.0
    %1094 = vmatpush.msra.mxu0 0.0
    %1095 = vmatpush.msra.mxu0 0.0
    %1096 = vmatpush.msra.mxu0 0.0
    %1097 = vmatpush.msra.mxu0 0.0
    %1098 = vmatpush.msra.mxu0 0.0
    %1099 = vmatpush.msra.mxu0 0.0
    %1100 = vmatpush.msra.mxu0 %v116
    %1101 = vmatpush.msra.mxu0 %v115
    %1102 = vmatpush.msra.mxu0 %v114
    %1103 = vmatpush.msra.mxu0 %v113
    %1104 = vmatmul.f32.gmra.mxu0 %v1086
    %v1105 = vpop.f32.mrf.mxu0
    %v1106 = vadd.f32 0.0, %v1105
    %1107 = vdwg.mxu0
    %v1108 = vadd.f32 %v1082, %v1106
    %v1109 = vxor.u32 %v1108, 2147483648
    %v1110 = vmul.f32 %v1109, 1.442695
    %v1111 = vpow.pop %v1110
    %v1112 = vadd.f32 %v1111, 1.0
    %v1113 = vrcp.pop %v1112
    %v1114 = vmul.f32 %v1112, %v1113
    %v1115 = vsub.f32 1.0, %v1114
    %v1116 = vmul.f32 %v1113, %v1115
    %v1117 = vadd.f32 %v1113, %v1116
    %vm1118 = vweird.f32 %v1112
    %vm1119 = vweird.f32 %v1113
    %vm1120 = vmor %vm1118, %vm1119
    %v1121 = vsel %vm1120, %v1113, %v1117
    %v1122 = vand.u32 2147483647, %v1112
    %vm1123 = vcmp.eq.f32.partialorder %v1122, 8.507059e+37
    %v1124 = vand.u32 %v1112, 2147483648
    %v1125 = vor.u32 1.1754944e-38, %v1124
    %v1126 = vsel %vm1123, %v1125, %v1121
    %v1127 = vmul.f32 1.0, %v1126
    %v1128 = vtanh.pop %v1108
    %v1129 = vmul.f32 %v1127, %v992
    %1131 = vrot.lane.b32.xlu0 %v1128, 64
    %v1132 = vpop.permute.xlu0 %1131
    %v1134 = vmul.f32 %v1127, %v1132
    %1136 = vrot.lane.b32.xlu0 %v1134, 32
    %v1137 = vpop.permute.xlu0 %1136
    %v1139 = vadd.f32 %v1129, %v1137
    %v1140 = vtanh.pop %v1139
    %1142 = vrot.lane.b32.xlu0 %v1140, 64
    %v1143 = vpop.permute.xlu0 %1142
    %v1145 = vmul.f32 %v1127, %v1143
    %v1146 = vadd.f32 %v103, %v1060
    %v1147 = vxor.u32 %v1146, 2147483648
    %v1148 = vmul.f32 %v1147, 1.442695
    %v1149 = vpow.pop %v1148
    %v1150 = vadd.f32 %v1149, 1.0
    %v1151 = vrcp.pop %v1150
    %v1152 = vmul.f32 %v1150, %v1151
    %v1153 = vsub.f32 1.0, %v1152
    %v1154 = vmul.f32 %v1151, %v1153
    %v1155 = vadd.f32 %v1151, %v1154
    %vm1156 = vweird.f32 %v1150
    %vm1157 = vweird.f32 %v1151
    %vm1158 = vmor %vm1156, %vm1157
    %v1159 = vsel %vm1158, %v1151, %v1155
    %v1160 = vand.u32 2147483647, %v1150
    %vm1161 = vcmp.eq.f32.partialorder %v1160, 8.507059e+37
    %v1162 = vand.u32 %v1150, 2147483648
    %v1163 = vor.u32 1.1754944e-38, %v1162
    %v1164 = vsel %vm1161, %v1163, %v1159
    %v1165 = vmul.f32 1.0, %v1164
    %v1166 = vtanh.pop %v1146
    %v1167 = vmul.f32 %v1165, %v1030
    %1169 = vrot.lane.b32.xlu0 %v1166, 64
    %v1170 = vpop.permute.xlu0 %1169
    %v1172 = vmul.f32 %v1165, %v1170
    %1174 = vrot.lane.b32.xlu0 %v1172, 32
    %v1175 = vpop.permute.xlu0 %1174
    %v1177 = vadd.f32 %v1167, %v1175
    %v1178 = vtanh.pop %v1177
    %1180 = vrot.lane.b32.xlu0 %v1178, 64
    %v1181 = vpop.permute.xlu0 %1180
    %v1183 = vmul.f32 %v1165, %v1181
    %1185 = vrot.lane.b32.xlu0 %v1183, 32
    %v1186 = vpop.permute.xlu0 %1185
    %v1187 = vsel %vm159, %v1186, 0
    %1189 = vmatpush.msra.mxu0 0.0
    %1190 = vmatpush.msra.mxu0 0.0
    %1191 = vmatpush.msra.mxu0 0.0
    %1192 = vmatpush.msra.mxu0 0.0
    %1193 = vmatpush.msra.mxu0 0.0
    %1194 = vmatpush.msra.mxu0 0.0
    %1195 = vmatpush.msra.mxu0 0.0
    %1196 = vmatpush.msra.mxu0 0.0
    %1197 = vmatpush.msra.mxu0 0.0
    %1198 = vmatpush.msra.mxu0 0.0
    %1199 = vmatpush.msra.mxu0 0.0
    %1200 = vmatpush.msra.mxu0 0.0
    %1201 = vmatpush.msra.mxu0 %v112
    %1202 = vmatpush.msra.mxu0 %v110
    %1203 = vmatpush.msra.mxu0 %v108
    %1204 = vmatpush.msra.mxu0 %v106
    %1205 = vmatmul.f32.gmra.mxu0 %v1187
    %v1206 = vpop.f32.mrf.mxu0
    %v1207 = vadd.f32 0.0, %v1206
    %1208 = vdwg.mxu0
    %v1209 = vadd.f32 %v1207, %v117
    %1211 = vrot.lane.b32.xlu0 %v1145, 32
    %v1212 = vpop.permute.xlu0 %1211
    %v1213 = vsel %vm159, %v1212, 0
    %1215 = vmatpush.msra.mxu0 0.0
    %1216 = vmatpush.msra.mxu0 0.0
    %1217 = vmatpush.msra.mxu0 0.0
    %1218 = vmatpush.msra.mxu0 0.0
    %1219 = vmatpush.msra.mxu0 0.0
    %1220 = vmatpush.msra.mxu0 0.0
    %1221 = vmatpush.msra.mxu0 0.0
    %1222 = vmatpush.msra.mxu0 0.0
    %1223 = vmatpush.msra.mxu0 0.0
    %1224 = vmatpush.msra.mxu0 0.0
    %1225 = vmatpush.msra.mxu0 0.0
    %1226 = vmatpush.msra.mxu0 0.0
    %1227 = vmatpush.msra.mxu0 %v116
    %1228 = vmatpush.msra.mxu0 %v115
    %1229 = vmatpush.msra.mxu0 %v114
    %1230 = vmatpush.msra.mxu0 %v113
    %1231 = vmatmul.f32.gmra.mxu0 %v1213
    %v1232 = vpop.f32.mrf.mxu0
    %v1233 = vadd.f32 0.0, %v1232
    %1234 = vdwg.mxu0
    %v1235 = vadd.f32 %v1209, %v1233
    %v1236 = vxor.u32 %v1235, 2147483648
    %v1237 = vmul.f32 %v1236, 1.442695
    %v1238 = vpow.pop %v1237
    %v1239 = vadd.f32 %v1238, 1.0
    %v1240 = vrcp.pop %v1239
    %v1241 = vmul.f32 %v1239, %v1240
    %v1242 = vsub.f32 1.0, %v1241
    %v1243 = vmul.f32 %v1240, %v1242
    %v1244 = vadd.f32 %v1240, %v1243
    %vm1245 = vweird.f32 %v1239
    %vm1246 = vweird.f32 %v1240
    %vm1247 = vmor %vm1245, %vm1246
    %v1248 = vsel %vm1247, %v1240, %v1244
    %v1249 = vand.u32 2147483647, %v1239
    %vm1250 = vcmp.eq.f32.partialorder %v1249, 8.507059e+37
    %v1251 = vand.u32 %v1239, 2147483648
    %v1252 = vor.u32 1.1754944e-38, %v1251
    %v1253 = vsel %vm1250, %v1252, %v1248
    %v1254 = vmul.f32 1.0, %v1253
    %v1255 = vtanh.pop %v1235
    %v1256 = vmul.f32 %v1254, %v1139
    %1258 = vrot.lane.b32.xlu0 %v1255, 64
    %v1259 = vpop.permute.xlu0 %1258
    %v1261 = vmul.f32 %v1254, %v1259
    %1263 = vrot.lane.b32.xlu0 %v1261, 32
    %v1264 = vpop.permute.xlu0 %1263
    %v1266 = vadd.f32 %v1256, %v1264
    %v1267 = vtanh.pop %v1266
    %1269 = vrot.lane.b32.xlu0 %v1267, 64
    %v1270 = vpop.permute.xlu0 %1269
    %v1272 = vmul.f32 %v1254, %v1270
    %v1273 = vld [vmem:[#allocation2 + $0xa0] sm:$0xff]
    %v1274 = vld [vmem:[#allocation2 + $0xb0] sm:$0xff]
    %v1275 = vld [vmem:[#allocation2 + $0xc0] sm:$0xff]
    %v1276 = vld [vmem:[#allocation2 + $0xd0] sm:$0xff]
    %v1277 = vld [vmem:[#allocation2 + $0xf0] ss:$0 sm:$0xff]
    %1279 = vrot.lane.b32.xlu0 %v1272, 32
    %v1280 = vpop.permute.xlu0 %1279
    %v1281 = vsel %vm159, %v1280, 0
    %1283 = vmatpush.msra.mxu0 0.0
    %1284 = vmatpush.msra.mxu0 0.0
    %1285 = vmatpush.msra.mxu0 0.0
    %1286 = vmatpush.msra.mxu0 0.0
    %1287 = vmatpush.msra.mxu0 0.0
    %1288 = vmatpush.msra.mxu0 0.0
    %1289 = vmatpush.msra.mxu0 0.0
    %1290 = vmatpush.msra.mxu0 0.0
    %1291 = vmatpush.msra.mxu0 0.0
    %1292 = vmatpush.msra.mxu0 0.0
    %1293 = vmatpush.msra.mxu0 0.0
    %1294 = vmatpush.msra.mxu0 0.0
    %1295 = vmatpush.msra.mxu0 %v1276
    %1296 = vmatpush.msra.mxu0 %v1275
    %1297 = vmatpush.msra.mxu0 %v1274
    %1298 = vmatpush.msra.mxu0 %v1273
    %1299 = vmatmul.f32.gmra.mxu0 %v1281
    %v1300 = vpop.f32.mrf.mxu0
    %v1301 = vadd.f32 %v1277, %v1300
    %1302 = vdwg.mxu0
    %1303 = vst [vmem:[#allocation5] sm:$0xff] %v1301
    // Predicated region
    $region14: #{tpu_custom_call.1} parent=1 // pred_check
      _
    $region15: #{tpu_custom_call.1} parent=1 // pred_check_branch
      %1305 = sbr.rel (0) target = $region17
    $region16: #{tpu_custom_call.1} parent=1 // pred_region
      %1307 = vsyncadd [#allocation4], 0
      %s1309 = sshll.u32 [#allocation5], 4
      %s1310 = int_to_ptr.vmem [resolvable:$true] %s1309
      %s1311 = sshll.u32 %s2, 4
      %s1312 = int_to_ptr.hbm [resolvable:$true] %s1311
      %1314 = dma.vmem_to_hbm [thread:$0]  %s1310, 128, %s1312, [#allocation4]
    $region17: #{tpu_custom_call.1} parent=1 // pred_fallthru
      _
    // Predicated region
    $region18: #{tpu_custom_call.1} parent=1 // pred_check
      _
    $region19: #{tpu_custom_call.1} parent=1 // pred_check_branch
      %1316 = sbr.rel (0) target = $region21
    $region20: #{tpu_custom_call.1} parent=1 // pred_region
      %1318 = dma.done [#allocation4], 128
    $region21: #{tpu_custom_call.1} parent=1 // pred_fallthru
      _
    %1319 = vsyncpa [#allocation3], 1
    %1320 = vsyncpa [#allocation4], 1

</llo_original>
